<compile_context>
chip_gen: v7x
topology: tpu7x:2x2x1
jax: 0.10.0
libtpu: 0.0.40
codegen_flags: <defaults>
</compile_context>

<pallas_src>
from math import sqrt
from functools import partial

import jax
import jax.numpy as jnp
from jax import lax
from jax.experimental import pallas as pl
from jax.experimental.pallas import tpu as pltpu


def _attention_layer_kernel(tgt_ref, src_ref, val_ref,
                            wq_ref, bq_ref, wk_ref, bk_ref,
                            wv_ref, bv_ref, wo_ref, bo_ref,
                            out_ref, *, n_heads, d_keys):
    bt, L, d_model = tgt_ref.shape
    _, S, _ = src_ref.shape
    H, E = n_heads, d_keys

    # Whole-block loads; merging the leading (sublane) axis is layout-free.
    x = tgt_ref[...].reshape(bt * L, tgt_ref.shape[2])     # (bt*L, d_model) bf16
    s = src_ref[...].reshape(bt * S, src_ref.shape[2])     # (bt*S, d_llm)  bf16
    vsrc = val_ref[...].reshape(bt * S, val_ref.shape[2])  # (bt*S, d_llm)  bf16

    # Projections: weights pre-transposed (in, out) in bf16, softmax scale
    # already folded into wq/bq; f32 accumulation on the MXU.
    q = jnp.dot(x, wq_ref[...], preferred_element_type=jnp.float32) + bq_ref[...]
    k = jnp.dot(s, wk_ref[...], preferred_element_type=jnp.float32) + bk_ref[...]
    v = jnp.dot(vsrc, wv_ref[...], preferred_element_type=jnp.float32) + bv_ref[...]

    # Head split: H lane slices per projection (independent of bt); leading
    # reshape + leading concat build a single heads-batched operand.
    def heads(t, rows):
        parts = [t[:, h * E:(h + 1) * E].reshape(bt, rows, E) for h in range(H)]
        return jnp.concatenate(parts, axis=0).astype(jnp.bfloat16)  # (H*bt, rows, E)

    qh = heads(q, L)      # (H*bt, L, E)
    kh = heads(k, S)      # (H*bt, S, E)
    vh = heads(v, S)      # (H*bt, S, E)

    # Batched QK^T and AV (batch dim = H*bt) with f32 accumulation.
    scores = lax.dot_general(qh, kh, (((2,), (2,)), ((0,), (0,))),
                             preferred_element_type=jnp.float32)    # (H*bt, L, S)

    m = jnp.max(scores, axis=-1, keepdims=True)
    e = jnp.exp(scores - m)
    p = e * pl.reciprocal(jnp.sum(e, axis=-1, keepdims=True), approx=True)
    # TODO(synk): attention dropout omitted (module evaluated in eval mode).

    o_h = lax.dot_general(p.astype(jnp.bfloat16), vh, (((2,), (1,)), ((0,), (0,))),
                          preferred_element_type=jnp.float32)       # (H*bt, L, E)

    # Merge heads back to (bt*L, H*E) matching PyTorch's (B, L, H, E) reshape:
    # H leading slices + leading reshape (free) + one lane-axis concat.
    o = jnp.concatenate(
        [o_h[h * bt:(h + 1) * bt].reshape(bt * L, E) for h in range(H)],
        axis=-1).astype(jnp.bfloat16)                               # (bt*L, H*E)

    y = jnp.dot(o, wo_ref[...], preferred_element_type=jnp.float32) + bo_ref[...]

    # Leading-axis split is layout-free; single whole-block store.
    out_ref[...] = y.reshape(bt, L, d_model).astype(out_ref.dtype)


def _tpu_vmem_and_cores():
    """Best-effort per-TensorCore VMEM capacity and TensorCores/chip."""
    vmem = 64 * 1024 * 1024       # conservative default: v7x has the smallest VMEM
    cores = 2                     # conservative default: keep grid >= 2 for megacore
    try:
        info = pltpu.get_tpu_info()
        cap = getattr(info, "vmem_capacity_bytes", None)
        if cap:
            vmem = int(cap)
        for name in ("num_tensorcores", "tensorcores_per_chip", "num_cores",
                     "cores_per_chip", "core_count"):
            c = getattr(info, name, None)
            if isinstance(c, int) and c > 0:
                cores = c
                break
    except Exception:
        pass
    return vmem, cores


def _choose_batch_tile(B, per_elem_bytes, budget_bytes, min_grid=1):
    """Largest divisor of B fitting the VMEM budget; keep grid >= min_grid."""
    best = 1
    for bt in range(1, B + 1):
        if B % bt != 0:
            continue
        if bt * per_elem_bytes > budget_bytes:
            continue
        if bt != 1 and B // bt < min_grid:
            continue
        best = bt
    return best


def attention_layer(target_embedding, source_embedding, value_embedding, params,
                    *, n_heads, block_b=None):
    """target: (B,L,d_model), source/value: (B,S,d_llm) -> (B,L,d_model) f32."""
    B, L, d_model = target_embedding.shape
    _, S, d_llm = source_embedding.shape
    wq, bq, wk, bk, wv, bv, wo, bo = params
    dkh = wq.shape[0]                 # d_keys * n_heads
    d_keys = dkh // n_heads
    scale = 1.0 / sqrt(d_keys)

    # One-time host-side prep: pre-transpose to (in, out), fold the softmax
    # scale into the query projection, bf16 matmul weights, bf16 activations.
    wq_t = (wq.T * scale).astype(jnp.bfloat16)
    wk_t = wk.T.astype(jnp.bfloat16)
    wv_t = wv.T.astype(jnp.bfloat16)
    wo_t = wo.T.astype(jnp.bfloat16)
    bq2 = (bq * scale).reshape(1, -1).astype(jnp.float32)
    bk2 = bk.reshape(1, -1).astype(jnp.float32)
    bv2 = bv.reshape(1, -1).astype(jnp.float32)
    bo2 = bo.reshape(1, -1).astype(jnp.float32)

    tgt_b = target_embedding.astype(jnp.bfloat16)
    src_b = source_embedding.astype(jnp.bfloat16)
    val_b = value_embedding.astype(jnp.bfloat16)

    vmem_cap, n_cores = _tpu_vmem_and_cores()
    # ~48 MiB on v7x (64 MiB physical), ~96 MiB on v5e/v6e (128 MiB physical).
    vmem_limit = min(int(vmem_cap * 0.75), 100 * 1024 * 1024)

    if block_b is None:
        bf16, f32 = 2, 4
        # Constant (grid-invariant) blocks: weights + biases, double-buffered.
        fixed = (2 * bf16 * (d_model * dkh + 2 * d_llm * dkh + dkh * d_model)
                 + 2 * f32 * (3 * dkh + d_model))
        # Per-batch-element footprint (blocks double-buffered + intermediates).
        per_elem = (2 * bf16 * (L * d_model + 2 * S * d_llm)     # input blocks
                    + 2 * bf16 * L * d_model                     # output block
                    + f32 * (L + 2 * S) * dkh                    # q / k / v (f32)
                    + bf16 * (L + 2 * S) * dkh                   # qh / kh / vh
                    + 3 * f32 * n_heads * L * S                  # scores / exp / p
                    + 2 * f32 * L * dkh                          # o_h + merged o
                    + 2 * f32 * L * d_model)                     # y + slack
        budget = max(int(vmem_cap * 0.55) - fixed, 0)
        min_grid = 2 if n_cores >= 2 else 1
        block_b = _choose_batch_tile(B, per_elem, budget, min_grid=min_grid)
    bt = block_b
    assert B % bt == 0, "batch tile must divide B"

    full = lambda a: pl.BlockSpec(a.shape, lambda i: (0,) * a.ndim)

    out = pl.pallas_call(
        partial(_attention_layer_kernel, n_heads=n_heads, d_keys=d_keys),
        out_shape=jax.ShapeDtypeStruct((B, L, d_model), jnp.bfloat16),
        grid_spec=pltpu.PrefetchScalarGridSpec(
            num_scalar_prefetch=0,
            grid=(B // bt,),
            in_specs=[
                pl.BlockSpec((bt, L, d_model), lambda i: (i, 0, 0)),
                pl.BlockSpec((bt, S, d_llm), lambda i: (i, 0, 0)),
                pl.BlockSpec((bt, S, d_llm), lambda i: (i, 0, 0)),
                full(wq_t), full(bq2),
                full(wk_t), full(bk2),
                full(wv_t), full(bv2),
                full(wo_t), full(bo2),
            ],
            out_specs=pl.BlockSpec((bt, L, d_model), lambda i: (i, 0, 0)),
        ),
        compiler_params=pltpu.CompilerParams(
            dimension_semantics=("parallel",),
            vmem_limit_bytes=vmem_limit),
    )(tgt_b, src_b, val_b, wq_t, bq2, wk_t, bk2, wv_t, bv2, wo_t, bo2)

    return out.astype(jnp.float32)


def reference_attention_layer(tgt, src, val, params, *, n_heads):
    """Pure-JAX (f32) replica of the PyTorch forward (eval mode)."""
    wq, bq, wk, bk, wv, bv, wo, bo = params
    B, L, _ = tgt.shape
    _, S, _ = src.shape
    H = n_heads
    q = (tgt @ wq.T + bq).reshape(B, L, H, -1)
    k = (src @ wk.T + bk).reshape(B, S, H, -1)
    v = (val @ wv.T + bv).reshape(B, S, H, -1)
    E = q.shape[-1]
    scores = jnp.einsum('blhe,bshe->bhls', q, k)
    a = jax.nn.softmax(scores / sqrt(E), axis=-1)
    o = jnp.einsum('bhls,bshe->blhe', a, v).reshape(B, L, -1)
    return o @ wo.T + bo


def init_params(key, d_model, d_llm, n_heads, d_keys=None):
    d_keys = d_keys or d_model // n_heads
    dkh = d_keys * n_heads
    ks = jax.random.split(key, 8)

    def lin(kw, kb, out_f, in_f):
        bound = 1.0 / sqrt(in_f)
        w = jax.random.uniform(kw, (out_f, in_f), jnp.float32, -bound, bound)
        b = jax.random.uniform(kb, (out_f,), jnp.float32, -bound, bound)
        return w, b

    wq, bq = lin(ks[0], ks[1], dkh, d_model)
    wk, bk = lin(ks[2], ks[3], dkh, d_llm)
    wv, bv = lin(ks[4], ks[5], dkh, d_llm)
    wo, bo = lin(ks[6], ks[7], d_model, dkh)
    return (wq, bq, wk, bk, wv, bv, wo, bo)


if __name__ == "__main__":
    B, L, S = 4, 8, 16
    d_model, d_llm, n_heads = 32, 48, 4

    key = jax.random.PRNGKey(0)
    k_p, k_t, k_s, k_v = jax.random.split(key, 4)

    params = init_params(k_p, d_model, d_llm, n_heads)
    tgt = jax.random.normal(k_t, (B, L, d_model), jnp.float32)
    src = jax.random.normal(k_s, (B, S, d_llm), jnp.float32)
    val = jax.random.normal(k_v, (B, S, d_llm), jnp.float32)

    out = attention_layer(tgt, src, val, params, n_heads=n_heads)
    out = jax.block_until_ready(out)

    ref = reference_attention_layer(tgt, src, val, params, n_heads=n_heads)
    assert out.shape == (B, L, d_model)
    # bf16 activations/weights/output + approx reciprocal -> loosened tolerance.
    assert jnp.allclose(out, ref, atol=5e-2, rtol=5e-2), "mismatch vs reference"

    print("KERNEL_OK")
</pallas_src>

<mosaic_0001>
module attributes {stable_mosaic.version = 11 : i64} {
  func.func @_attention_layer_kernel(%arg0: i32, %arg1: memref<2x8x32xbf16, #tpu.memory_space<vmem>>, %arg2: memref<2x16x48xbf16, #tpu.memory_space<vmem>>, %arg3: memref<2x16x48xbf16, #tpu.memory_space<vmem>>, %arg4: memref<32x32xbf16, #tpu.memory_space<vmem>>, %arg5: memref<1x32xf32, #tpu.memory_space<vmem>>, %arg6: memref<48x32xbf16, #tpu.memory_space<vmem>>, %arg7: memref<1x32xf32, #tpu.memory_space<vmem>>, %arg8: memref<48x32xbf16, #tpu.memory_space<vmem>>, %arg9: memref<1x32xf32, #tpu.memory_space<vmem>>, %arg10: memref<32x32xbf16, #tpu.memory_space<vmem>>, %arg11: memref<1x32xf32, #tpu.memory_space<vmem>>, %arg12: memref<2x8x32xbf16, #tpu.memory_space<vmem>>) attributes {dimension_semantics = [#tpu.dimension_semantics<parallel>], iteration_bounds = array<i64: 2>, scalar_prefetch = 0 : i64, scratch_operands = 0 : i64, tpu.core_type = #tpu.core_type<tc>, window_params = [{transform_indices = @transform_0, window_bounds = array<i64: 2, 8, 32>}, {transform_indices = @transform_1, window_bounds = array<i64: 2, 16, 48>}, {transform_indices = @transform_2, window_bounds = array<i64: 2, 16, 48>}, {pipeline_mode = #tpu.pipeline_mode<synchronous>, transform_indices = @transform_3, window_bounds = array<i64: 32, 32>}, {pipeline_mode = #tpu.pipeline_mode<synchronous>, transform_indices = @transform_4, window_bounds = array<i64: 1, 32>}, {pipeline_mode = #tpu.pipeline_mode<synchronous>, transform_indices = @transform_5, window_bounds = array<i64: 48, 32>}, {pipeline_mode = #tpu.pipeline_mode<synchronous>, transform_indices = @transform_6, window_bounds = array<i64: 1, 32>}, {pipeline_mode = #tpu.pipeline_mode<synchronous>, transform_indices = @transform_7, window_bounds = array<i64: 48, 32>}, {pipeline_mode = #tpu.pipeline_mode<synchronous>, transform_indices = @transform_8, window_bounds = array<i64: 1, 32>}, {pipeline_mode = #tpu.pipeline_mode<synchronous>, transform_indices = @transform_9, window_bounds = array<i64: 32, 32>}, {pipeline_mode = #tpu.pipeline_mode<synchronous>, transform_indices = @transform_10, window_bounds = array<i64: 1, 32>}, {transform_indices = @transform_11, window_bounds = array<i64: 2, 8, 32>}]} {
    %c0 = arith.constant 0 : index
    %c0_0 = arith.constant 0 : index
    %c0_1 = arith.constant 0 : index
    %0 = vector.load %arg1[%c0, %c0_0, %c0_1] : memref<2x8x32xbf16, #tpu.memory_space<vmem>>, vector<2x8x32xbf16>
    %1 = vector.shape_cast %0 : vector<2x8x32xbf16> to vector<16x32xbf16>
    %c0_2 = arith.constant 0 : index
    %c0_3 = arith.constant 0 : index
    %c0_4 = arith.constant 0 : index
    %2 = vector.load %arg2[%c0_2, %c0_3, %c0_4] : memref<2x16x48xbf16, #tpu.memory_space<vmem>>, vector<2x16x48xbf16>
    %3 = vector.shape_cast %2 : vector<2x16x48xbf16> to vector<32x48xbf16>
    %c0_5 = arith.constant 0 : index
    %c0_6 = arith.constant 0 : index
    %c0_7 = arith.constant 0 : index
    %4 = vector.load %arg3[%c0_5, %c0_6, %c0_7] : memref<2x16x48xbf16, #tpu.memory_space<vmem>>, vector<2x16x48xbf16>
    %5 = vector.shape_cast %4 : vector<2x16x48xbf16> to vector<32x48xbf16>
    %c0_8 = arith.constant 0 : index
    %c0_9 = arith.constant 0 : index
    %6 = vector.load %arg4[%c0_8, %c0_9] : memref<32x32xbf16, #tpu.memory_space<vmem>>, vector<32x32xbf16>
    %cst = arith.constant dense<0.000000e+00> : vector<16x32xf32>
    %7 = tpu.matmul %1, %6, %cst {dimension_numbers = #tpu.dot_dimension_numbers<[1], [0], [0], [1], [0, 0, 1, 1], [], []>} : vector<16x32xbf16>, vector<32x32xbf16>, vector<16x32xf32> -> vector<16x32xf32>
    %c0_10 = arith.constant 0 : index
    %c0_11 = arith.constant 0 : index
    %8 = vector.load %arg5[%c0_10, %c0_11] : memref<1x32xf32, #tpu.memory_space<vmem>>, vector<1x32xf32>
    %9 = vector.broadcast %8 : vector<1x32xf32> to vector<16x32xf32>
    %10 = arith.addf %7, %9 : vector<16x32xf32>
    %c0_12 = arith.constant 0 : index
    %c0_13 = arith.constant 0 : index
    %11 = vector.load %arg6[%c0_12, %c0_13] : memref<48x32xbf16, #tpu.memory_space<vmem>>, vector<48x32xbf16>
    %cst_14 = arith.constant dense<0.000000e+00> : vector<32x32xf32>
    %12 = tpu.matmul %3, %11, %cst_14 {dimension_numbers = #tpu.dot_dimension_numbers<[1], [0], [0], [1], [0, 0, 1, 1], [], []>} : vector<32x48xbf16>, vector<48x32xbf16>, vector<32x32xf32> -> vector<32x32xf32>
    %c0_15 = arith.constant 0 : index
    %c0_16 = arith.constant 0 : index
    %13 = vector.load %arg7[%c0_15, %c0_16] : memref<1x32xf32, #tpu.memory_space<vmem>>, vector<1x32xf32>
    %14 = vector.broadcast %13 : vector<1x32xf32> to vector<32x32xf32>
    %15 = arith.addf %12, %14 : vector<32x32xf32>
    %c0_17 = arith.constant 0 : index
    %c0_18 = arith.constant 0 : index
    %16 = vector.load %arg8[%c0_17, %c0_18] : memref<48x32xbf16, #tpu.memory_space<vmem>>, vector<48x32xbf16>
    %cst_19 = arith.constant dense<0.000000e+00> : vector<32x32xf32>
    %17 = tpu.matmul %5, %16, %cst_19 {dimension_numbers = #tpu.dot_dimension_numbers<[1], [0], [0], [1], [0, 0, 1, 1], [], []>} : vector<32x48xbf16>, vector<48x32xbf16>, vector<32x32xf32> -> vector<32x32xf32>
    %c0_20 = arith.constant 0 : index
    %c0_21 = arith.constant 0 : index
    %18 = vector.load %arg9[%c0_20, %c0_21] : memref<1x32xf32, #tpu.memory_space<vmem>>, vector<1x32xf32>
    %19 = vector.broadcast %18 : vector<1x32xf32> to vector<32x32xf32>
    %20 = arith.addf %17, %19 : vector<32x32xf32>
    %21 = vector.extract_strided_slice %10 {offsets = [0, 0], sizes = [16, 8], strides = [1, 1]} : vector<16x32xf32> to vector<16x8xf32>
    %22 = vector.shape_cast %21 : vector<16x8xf32> to vector<2x8x8xf32>
    %23 = vector.extract_strided_slice %10 {offsets = [0, 8], sizes = [16, 8], strides = [1, 1]} : vector<16x32xf32> to vector<16x8xf32>
    %24 = vector.shape_cast %23 : vector<16x8xf32> to vector<2x8x8xf32>
    %25 = vector.extract_strided_slice %10 {offsets = [0, 16], sizes = [16, 8], strides = [1, 1]} : vector<16x32xf32> to vector<16x8xf32>
    %26 = vector.shape_cast %25 : vector<16x8xf32> to vector<2x8x8xf32>
    %27 = vector.extract_strided_slice %10 {offsets = [0, 24], sizes = [16, 8], strides = [1, 1]} : vector<16x32xf32> to vector<16x8xf32>
    %28 = vector.shape_cast %27 : vector<16x8xf32> to vector<2x8x8xf32>
    %29 = tpu.concatenate %22, %24, %26, %28 in 0 : vector<2x8x8xf32>, vector<2x8x8xf32>, vector<2x8x8xf32>, vector<2x8x8xf32> -> vector<8x8x8xf32>
    %30 = arith.truncf %29 : vector<8x8x8xf32> to vector<8x8x8xbf16>
    %31 = vector.extract_strided_slice %15 {offsets = [0, 0], sizes = [32, 8], strides = [1, 1]} : vector<32x32xf32> to vector<32x8xf32>
    %32 = vector.shape_cast %31 : vector<32x8xf32> to vector<2x16x8xf32>
    %33 = vector.extract_strided_slice %15 {offsets = [0, 8], sizes = [32, 8], strides = [1, 1]} : vector<32x32xf32> to vector<32x8xf32>
    %34 = vector.shape_cast %33 : vector<32x8xf32> to vector<2x16x8xf32>
    %35 = vector.extract_strided_slice %15 {offsets = [0, 16], sizes = [32, 8], strides = [1, 1]} : vector<32x32xf32> to vector<32x8xf32>
    %36 = vector.shape_cast %35 : vector<32x8xf32> to vector<2x16x8xf32>
    %37 = vector.extract_strided_slice %15 {offsets = [0, 24], sizes = [32, 8], strides = [1, 1]} : vector<32x32xf32> to vector<32x8xf32>
    %38 = vector.shape_cast %37 : vector<32x8xf32> to vector<2x16x8xf32>
    %39 = tpu.concatenate %32, %34, %36, %38 in 0 : vector<2x16x8xf32>, vector<2x16x8xf32>, vector<2x16x8xf32>, vector<2x16x8xf32> -> vector<8x16x8xf32>
    %40 = arith.truncf %39 : vector<8x16x8xf32> to vector<8x16x8xbf16>
    %41 = vector.extract_strided_slice %20 {offsets = [0, 0], sizes = [32, 8], strides = [1, 1]} : vector<32x32xf32> to vector<32x8xf32>
    %42 = vector.shape_cast %41 : vector<32x8xf32> to vector<2x16x8xf32>
    %43 = vector.extract_strided_slice %20 {offsets = [0, 8], sizes = [32, 8], strides = [1, 1]} : vector<32x32xf32> to vector<32x8xf32>
    %44 = vector.shape_cast %43 : vector<32x8xf32> to vector<2x16x8xf32>
    %45 = vector.extract_strided_slice %20 {offsets = [0, 16], sizes = [32, 8], strides = [1, 1]} : vector<32x32xf32> to vector<32x8xf32>
    %46 = vector.shape_cast %45 : vector<32x8xf32> to vector<2x16x8xf32>
    %47 = vector.extract_strided_slice %20 {offsets = [0, 24], sizes = [32, 8], strides = [1, 1]} : vector<32x32xf32> to vector<32x8xf32>
    %48 = vector.shape_cast %47 : vector<32x8xf32> to vector<2x16x8xf32>
    %49 = tpu.concatenate %42, %44, %46, %48 in 0 : vector<2x16x8xf32>, vector<2x16x8xf32>, vector<2x16x8xf32>, vector<2x16x8xf32> -> vector<8x16x8xf32>
    %50 = arith.truncf %49 : vector<8x16x8xf32> to vector<8x16x8xbf16>
    %cst_22 = arith.constant dense<0.000000e+00> : vector<8x8x16xf32>
    %51 = tpu.matmul %30, %40, %cst_22 {dimension_numbers = #tpu.dot_dimension_numbers<[2], [2], [1], [1], [0, 0, 0, 1, 1, 1], [0], [0]>} : vector<8x8x8xbf16>, vector<8x16x8xbf16>, vector<8x8x16xf32> -> vector<8x8x16xf32>
    %cst_23 = arith.constant dense<0xFF800000> : vector<8x8xf32>
    %52 = vector.multi_reduction <maximumf>, %51, %cst_23 [2] : vector<8x8x16xf32> to vector<8x8xf32>
    %53 = vector.shape_cast %52 : vector<8x8xf32> to vector<8x8x1xf32>
    %54 = vector.broadcast %53 : vector<8x8x1xf32> to vector<8x8x16xf32>
    %55 = arith.subf %51, %54 : vector<8x8x16xf32>
    %56 = math.exp %55 : vector<8x8x16xf32>
    %cst_24 = arith.constant dense<0.000000e+00> : vector<8x8xf32>
    %57 = vector.multi_reduction <add>, %56, %cst_24 [2] : vector<8x8x16xf32> to vector<8x8xf32>
    %58 = vector.shape_cast %57 : vector<8x8xf32> to vector<8x8x1xf32>
    %59 = tpu.reciprocal %58 {approx = true} : vector<8x8x1xf32> -> vector<8x8x1xf32>
    %60 = vector.broadcast %59 : vector<8x8x1xf32> to vector<8x8x16xf32>
    %61 = arith.mulf %56, %60 : vector<8x8x16xf32>
    %62 = arith.truncf %61 : vector<8x8x16xf32> to vector<8x8x16xbf16>
    %cst_25 = arith.constant dense<0.000000e+00> : vector<8x8x8xf32>
    %63 = tpu.matmul %62, %50, %cst_25 {dimension_numbers = #tpu.dot_dimension_numbers<[2], [1], [1], [2], [0, 0, 0, 1, 1, 2], [0], [0]>} : vector<8x8x16xbf16>, vector<8x16x8xbf16>, vector<8x8x8xf32> -> vector<8x8x8xf32>
    %64 = vector.extract_strided_slice %63 {offsets = [0, 0, 0], sizes = [2, 8, 8], strides = [1, 1, 1]} : vector<8x8x8xf32> to vector<2x8x8xf32>
    %65 = vector.shape_cast %64 : vector<2x8x8xf32> to vector<16x8xf32>
    %66 = vector.extract_strided_slice %63 {offsets = [2, 0, 0], sizes = [2, 8, 8], strides = [1, 1, 1]} : vector<8x8x8xf32> to vector<2x8x8xf32>
    %67 = vector.shape_cast %66 : vector<2x8x8xf32> to vector<16x8xf32>
    %68 = vector.extract_strided_slice %63 {offsets = [4, 0, 0], sizes = [2, 8, 8], strides = [1, 1, 1]} : vector<8x8x8xf32> to vector<2x8x8xf32>
    %69 = vector.shape_cast %68 : vector<2x8x8xf32> to vector<16x8xf32>
    %70 = vector.extract_strided_slice %63 {offsets = [6, 0, 0], sizes = [2, 8, 8], strides = [1, 1, 1]} : vector<8x8x8xf32> to vector<2x8x8xf32>
    %71 = vector.shape_cast %70 : vector<2x8x8xf32> to vector<16x8xf32>
    %72 = tpu.concatenate %65, %67, %69, %71 in 1 : vector<16x8xf32>, vector<16x8xf32>, vector<16x8xf32>, vector<16x8xf32> -> vector<16x32xf32>
    %73 = arith.truncf %72 : vector<16x32xf32> to vector<16x32xbf16>
    %c0_26 = arith.constant 0 : index
    %c0_27 = arith.constant 0 : index
    %74 = vector.load %arg10[%c0_26, %c0_27] : memref<32x32xbf16, #tpu.memory_space<vmem>>, vector<32x32xbf16>
    %cst_28 = arith.constant dense<0.000000e+00> : vector<16x32xf32>
    %75 = tpu.matmul %73, %74, %cst_28 {dimension_numbers = #tpu.dot_dimension_numbers<[1], [0], [0], [1], [0, 0, 1, 1], [], []>} : vector<16x32xbf16>, vector<32x32xbf16>, vector<16x32xf32> -> vector<16x32xf32>
    %c0_29 = arith.constant 0 : index
    %c0_30 = arith.constant 0 : index
    %76 = vector.load %arg11[%c0_29, %c0_30] : memref<1x32xf32, #tpu.memory_space<vmem>>, vector<1x32xf32>
    %77 = vector.broadcast %76 : vector<1x32xf32> to vector<16x32xf32>
    %78 = arith.addf %75, %77 : vector<16x32xf32>
    %79 = vector.shape_cast %78 : vector<16x32xf32> to vector<2x8x32xf32>
    %80 = arith.truncf %79 : vector<2x8x32xf32> to vector<2x8x32xbf16>
    %c0_31 = arith.constant 0 : index
    %c0_32 = arith.constant 0 : index
    %c0_33 = arith.constant 0 : index
    %81 = vector.load %arg12[%c0_31, %c0_32, %c0_33] : memref<2x8x32xbf16, #tpu.memory_space<vmem>>, vector<2x8x32xbf16>
    tpu.vector_store %arg12[%c0_31, %c0_32, %c0_33], %80 {strides = array<i32>} : memref<2x8x32xbf16, #tpu.memory_space<vmem>>, vector<2x8x32xbf16>,
    return
  }
  func.func @transform_0(%arg0: i32) -> (i32, i32, i32) {
    %c0_i32 = arith.constant 0 : i32
    %c0_i32_0 = arith.constant 0 : i32
    %c0_i32_1 = arith.constant 0 : i32
    return %arg0, %c0_i32, %c0_i32_0 : i32, i32, i32
  }
  func.func @transform_1(%arg0: i32) -> (i32, i32, i32) {
    %c0_i32 = arith.constant 0 : i32
    %c0_i32_0 = arith.constant 0 : i32
    %c0_i32_1 = arith.constant 0 : i32
    return %arg0, %c0_i32, %c0_i32_0 : i32, i32, i32
  }
  func.func @transform_2(%arg0: i32) -> (i32, i32, i32) {
    %c0_i32 = arith.constant 0 : i32
    %c0_i32_0 = arith.constant 0 : i32
    %c0_i32_1 = arith.constant 0 : i32
    return %arg0, %c0_i32, %c0_i32_0 : i32, i32, i32
  }
  func.func @transform_3(%arg0: i32) -> (i32, i32) {
    %c0_i32 = arith.constant 0 : i32
    %c0_i32_0 = arith.constant 0 : i32
    %c0_i32_1 = arith.constant 0 : i32
    return %c0_i32, %c0_i32_0 : i32, i32
  }
  func.func @transform_4(%arg0: i32) -> (i32, i32) {
    %c0_i32 = arith.constant 0 : i32
    %c0_i32_0 = arith.constant 0 : i32
    %c0_i32_1 = arith.constant 0 : i32
    return %c0_i32, %c0_i32_0 : i32, i32
  }
  func.func @transform_5(%arg0: i32) -> (i32, i32) {
    %c0_i32 = arith.constant 0 : i32
    %c0_i32_0 = arith.constant 0 : i32
    %c0_i32_1 = arith.constant 0 : i32
    return %c0_i32, %c0_i32_0 : i32, i32
  }
  func.func @transform_6(%arg0: i32) -> (i32, i32) {
    %c0_i32 = arith.constant 0 : i32
    %c0_i32_0 = arith.constant 0 : i32
    %c0_i32_1 = arith.constant 0 : i32
    return %c0_i32, %c0_i32_0 : i32, i32
  }
  func.func @transform_7(%arg0: i32) -> (i32, i32) {
    %c0_i32 = arith.constant 0 : i32
    %c0_i32_0 = arith.constant 0 : i32
    %c0_i32_1 = arith.constant 0 : i32
    return %c0_i32, %c0_i32_0 : i32, i32
  }
  func.func @transform_8(%arg0: i32) -> (i32, i32) {
    %c0_i32 = arith.constant 0 : i32
    %c0_i32_0 = arith.constant 0 : i32
    %c0_i32_1 = arith.constant 0 : i32
    return %c0_i32, %c0_i32_0 : i32, i32
  }
  func.func @transform_9(%arg0: i32) -> (i32, i32) {
    %c0_i32 = arith.constant 0 : i32
    %c0_i32_0 = arith.constant 0 : i32
    %c0_i32_1 = arith.constant 0 : i32
    return %c0_i32, %c0_i32_0 : i32, i32
  }
  func.func @transform_10(%arg0: i32) -> (i32, i32) {
    %c0_i32 = arith.constant 0 : i32
    %c0_i32_0 = arith.constant 0 : i32
    %c0_i32_1 = arith.constant 0 : i32
    return %c0_i32, %c0_i32_0 : i32, i32
  }
  func.func @transform_11(%arg0: i32) -> (i32, i32, i32) {
    %c0_i32 = arith.constant 0 : i32
    %c0_i32_0 = arith.constant 0 : i32
    %c0_i32_1 = arith.constant 0 : i32
    return %arg0, %c0_i32, %c0_i32_0 : i32, i32, i32
  }
}

</mosaic_0001>

<llo_original>
// kernel: tpu_custom_call.1
$region0: #{tpu_custom_call.1}
  #allocation0 [shape = 'u32[]', space=smem, size = 0x4, offset = 0x4, fixed_abs, tag = 'smem constant byte address 0x4 - core index']
  #allocation1 [shape = 'u32[144,128]{1,0:T(1,128)}', space=vmem, size = 0x12000, scoped, tag = 'internal scratch']
  %s0 = inlined_call_operand.vmem [shape: bf16[4,8,32], index: 0, kind: input, shape index: {}]
  %s1 = inlined_call_operand.vmem [shape: bf16[4,16,48], index: 1, kind: input, shape index: {}]
  %s2 = inlined_call_operand.vmem [shape: bf16[4,16,48], index: 2, kind: input, shape index: {}]
  %s3 = inlined_call_operand.hbm [shape: bf16[32,32], index: 3, kind: input, shape index: {}]
  %s4 = inlined_call_operand.vmem [shape: f32[1,32], index: 4, kind: input, shape index: {}]
  %s5 = inlined_call_operand.vmem [shape: bf16[48,32], index: 5, kind: input, shape index: {}]
  %s6 = inlined_call_operand.vmem [shape: f32[1,32], index: 6, kind: input, shape index: {}]
  %s7 = inlined_call_operand.vmem [shape: bf16[48,32], index: 7, kind: input, shape index: {}]
  %s8 = inlined_call_operand.vmem [shape: f32[1,32], index: 8, kind: input, shape index: {}]
  %s9 = inlined_call_operand.vmem [shape: bf16[32,32], index: 9, kind: input, shape index: {}]
  %s10 = inlined_call_operand.vmem [shape: f32[1,32], index: 10, kind: input, shape index: {}]
  %s11 = inlined_call_operand.hbm [shape: bf16[4,8,32], index: 11, kind: output, shape index: {}]
  %s12 = sld [smem:[#allocation0]]
  $region81: #{tpu_custom_call.1} parent=0
    _
  %s14 = ssub.s32 1, %s12
  %s15 = scalar_select 0, %s14, %s12
  $region1: #{tpu_custom_call.1} parent=0
    #allocation2 [shape = 'u8[8192]{0}', space=vmem, size = 0x2000, scoped, tag = 'input window, operand 3, single buffered']
    #allocation3 [shape = 's32[2]{0}', space=sflag, size = 0x8, scoped, tag = 'scoped memory for tpu_custom_call.1']
    #allocation4 [shape = 's32[2]{0}', space=sflag, size = 0x8, scoped, tag = 'scoped memory for tpu_custom_call.1']
    #allocation5 [shape = 'u8[8192]{0}', space=vmem, size = 0x2000, scoped, tag = 'output window, operand 0']
    %16 = vsyncpa [#allocation3], 0
    %17 = vsyncpa [#allocation4], 0
    %s18 = scalar_lea.sflag [#allocation4], 1
    %19 = vsyncpa %s18, 0
    loop: start=0, step=1, limit=4
    $region2: #{tpu_custom_call.1} parent=1 // loop_pre_header
      _
    $region3: #{tpu_custom_call.1} parent=1 // loop_header
      %s21 = sphi 0, %s25
      %p22 = scmp.ge.s32.totalorder %s21, 4
      %s31 = sphi 0, %s33
      %s34 = sphi 0, %s31
      %s35 = sphi 0, %s34
      %s51 = sphi 0, %s35
      %s57 = sphi 0, %s59
      %s60 = sphi 0, %s57
      %s61 = sphi 0, %s60
      %s77 = sphi 0, %s61
      %s83 = sphi 0, %s85
      %s86 = sphi 0, %s83
      %s87 = sphi 0, %s86
      %s103 = sphi 0, %s87
      %s107 = sphi 0, %s107
      %s109 = sphi 0, %s107
      %s110 = sphi 0, %s109
      %s124 = sphi 0, %s110
      %s128 = sphi 0, %s128
      %s130 = sphi 0, %s128
      %s131 = sphi 0, %s130
      %s145 = sphi 0, %s131
      %s149 = sphi 0, %s149
      %s151 = sphi 0, %s149
      %s152 = sphi 0, %s151
      %s166 = sphi 0, %s152
      %s170 = sphi 0, %s170
      %s172 = sphi 0, %s170
      %s173 = sphi 0, %s172
      %s187 = sphi 0, %s173
      %s191 = sphi 0, %s191
      %s193 = sphi 0, %s191
      %s194 = sphi 0, %s193
      %s208 = sphi 0, %s194
      %s212 = sphi 0, %s212
      %s214 = sphi 0, %s212
      %s215 = sphi 0, %s214
      %s229 = sphi 0, %s215
      %s233 = sphi 0, %s233
      %s235 = sphi 0, %s233
      %s236 = sphi 0, %s235
      %s250 = sphi 0, %s236
      %s254 = sphi 0, %s254
      %s256 = sphi 0, %s254
      %s257 = sphi 0, %s256
      %s271 = sphi 0, %s257
      %s277 = sphi 0, %s279
      %s280 = sphi 0, %s277
      %s281 = sphi 0, %s280
      %s297 = sphi 0, %s281
    $region4: #{tpu_custom_call.1} parent=1 // loop_header_branch
      %24 = sbr.rel (%p22) target = $region8
    $region5: #{tpu_custom_call.1} parent=1 // loop_body
      %s26 = ssub.s32 %s21, 1
      %s27 = ssub.s32 %s21, 2
      %s28 = sadd.s32 %s21, 1
      %s29 = ssub.s32 %s21, %s28
      %p30 = scmp.eq.s32.totalorder %s29, 0
      %s32 = sadd.s32 %s31, 1
      %s33 = scalar_select %p30, %s31, %s32
      %p36 = pneg %p30
      %p37 = scmp.eq.s32.totalorder %s21, 1
      %p38 = por %p36, %p37
      %p39 = scmp.ne.s32.totalorder %s31, %s34
      %p40 = scmp.eq.s32.totalorder %s21, 0
      %p41 = por %p39, %p40
      %p42 = scmp.ne.s32.totalorder %s31, %s34
      %p43 = scmp.eq.s32.totalorder %s26, 1
      %p44 = por %p42, %p43
      %p45 = scmp.ne.s32.totalorder %s34, %s35
      %p46 = scmp.eq.s32.totalorder %s26, 0
      %p47 = por %p45, %p46
      %p48 = scmp.ne.s32.totalorder %s34, %s35
      %p49 = scmp.eq.s32.totalorder %s27, 1
      %p50 = por %p48, %p49
      %p52 = scmp.ne.s32.totalorder %s35, %s51
      %p53 = scmp.eq.s32.totalorder %s27, 0
      %p54 = por %p52, %p53
      %s55 = ssub.s32 %s21, %s28
      %p56 = scmp.eq.s32.totalorder %s55, 0
      %s58 = sadd.s32 %s57, 1
      %s59 = scalar_select %p56, %s57, %s58
      %p62 = pneg %p56
      %p63 = scmp.eq.s32.totalorder %s21, 1
      %p64 = por %p62, %p63
      %p65 = scmp.ne.s32.totalorder %s57, %s60
      %p66 = scmp.eq.s32.totalorder %s21, 0
      %p67 = por %p65, %p66
      %p68 = scmp.ne.s32.totalorder %s57, %s60
      %p69 = scmp.eq.s32.totalorder %s26, 1
      %p70 = por %p68, %p69
      %p71 = scmp.ne.s32.totalorder %s60, %s61
      %p72 = scmp.eq.s32.totalorder %s26, 0
      %p73 = por %p71, %p72
      %p74 = scmp.ne.s32.totalorder %s60, %s61
      %p75 = scmp.eq.s32.totalorder %s27, 1
      %p76 = por %p74, %p75
      %p78 = scmp.ne.s32.totalorder %s61, %s77
      %p79 = scmp.eq.s32.totalorder %s27, 0
      %p80 = por %p78, %p79
      %s81 = ssub.s32 %s21, %s28
      %p82 = scmp.eq.s32.totalorder %s81, 0
      %s84 = sadd.s32 %s83, 1
      %s85 = scalar_select %p82, %s83, %s84
      %p88 = pneg %p82
      %p89 = scmp.eq.s32.totalorder %s21, 1
      %p90 = por %p88, %p89
      %p91 = scmp.ne.s32.totalorder %s83, %s86
      %p92 = scmp.eq.s32.totalorder %s21, 0
      %p93 = por %p91, %p92
      %p94 = scmp.ne.s32.totalorder %s83, %s86
      %p95 = scmp.eq.s32.totalorder %s26, 1
      %p96 = por %p94, %p95
      %p97 = scmp.ne.s32.totalorder %s86, %s87
      %p98 = scmp.eq.s32.totalorder %s26, 0
      %p99 = por %p97, %p98
      %p100 = scmp.ne.s32.totalorder %s86, %s87
      %p101 = scmp.eq.s32.totalorder %s27, 1
      %p102 = por %p100, %p101
      %p104 = scmp.ne.s32.totalorder %s87, %s103
      %p105 = scmp.eq.s32.totalorder %s27, 0
      %p106 = por %p104, %p105
      %s108 = sadd.s32 %s107, 1
      %p111 = scmp.eq.s32.totalorder %s21, 1
      %p112 = scmp.ne.s32.totalorder %s107, %s109
      %p113 = scmp.eq.s32.totalorder %s21, 0
      %p114 = por %p112, %p113
      %p115 = scmp.ne.s32.totalorder %s107, %s109
      %p116 = scmp.eq.s32.totalorder %s26, 1
      %p117 = por %p115, %p116
      %p118 = scmp.ne.s32.totalorder %s109, %s110
      %p119 = scmp.eq.s32.totalorder %s26, 0
      %p120 = por %p118, %p119
      %p121 = scmp.ne.s32.totalorder %s109, %s110
      %p122 = scmp.eq.s32.totalorder %s27, 1
      %p123 = por %p121, %p122
      %p125 = scmp.ne.s32.totalorder %s110, %s124
      %p126 = scmp.eq.s32.totalorder %s27, 0
      %p127 = por %p125, %p126
      %s129 = sadd.s32 %s128, 1
      %p132 = scmp.eq.s32.totalorder %s21, 1
      %p133 = scmp.ne.s32.totalorder %s128, %s130
      %p134 = scmp.eq.s32.totalorder %s21, 0
      %p135 = por %p133, %p134
      %p136 = scmp.ne.s32.totalorder %s128, %s130
      %p137 = scmp.eq.s32.totalorder %s26, 1
      %p138 = por %p136, %p137
      %p139 = scmp.ne.s32.totalorder %s130, %s131
      %p140 = scmp.eq.s32.totalorder %s26, 0
      %p141 = por %p139, %p140
      %p142 = scmp.ne.s32.totalorder %s130, %s131
      %p143 = scmp.eq.s32.totalorder %s27, 1
      %p144 = por %p142, %p143
      %p146 = scmp.ne.s32.totalorder %s131, %s145
      %p147 = scmp.eq.s32.totalorder %s27, 0
      %p148 = por %p146, %p147
      %s150 = sadd.s32 %s149, 1
      %p153 = scmp.eq.s32.totalorder %s21, 1
      %p154 = scmp.ne.s32.totalorder %s149, %s151
      %p155 = scmp.eq.s32.totalorder %s21, 0
      %p156 = por %p154, %p155
      %p157 = scmp.ne.s32.totalorder %s149, %s151
      %p158 = scmp.eq.s32.totalorder %s26, 1
      %p159 = por %p157, %p158
      %p160 = scmp.ne.s32.totalorder %s151, %s152
      %p161 = scmp.eq.s32.totalorder %s26, 0
      %p162 = por %p160, %p161
      %p163 = scmp.ne.s32.totalorder %s151, %s152
      %p164 = scmp.eq.s32.totalorder %s27, 1
      %p165 = por %p163, %p164
      %p167 = scmp.ne.s32.totalorder %s152, %s166
      %p168 = scmp.eq.s32.totalorder %s27, 0
      %p169 = por %p167, %p168
      %s171 = sadd.s32 %s170, 1
      %p174 = scmp.eq.s32.totalorder %s21, 1
      %p175 = scmp.ne.s32.totalorder %s170, %s172
      %p176 = scmp.eq.s32.totalorder %s21, 0
      %p177 = por %p175, %p176
      %p178 = scmp.ne.s32.totalorder %s170, %s172
      %p179 = scmp.eq.s32.totalorder %s26, 1
      %p180 = por %p178, %p179
      %p181 = scmp.ne.s32.totalorder %s172, %s173
      %p182 = scmp.eq.s32.totalorder %s26, 0
      %p183 = por %p181, %p182
      %p184 = scmp.ne.s32.totalorder %s172, %s173
      %p185 = scmp.eq.s32.totalorder %s27, 1
      %p186 = por %p184, %p185
      %p188 = scmp.ne.s32.totalorder %s173, %s187
      %p189 = scmp.eq.s32.totalorder %s27, 0
      %p190 = por %p188, %p189
      %s192 = sadd.s32 %s191, 1
      %p195 = scmp.eq.s32.totalorder %s21, 1
      %p196 = scmp.ne.s32.totalorder %s191, %s193
      %p197 = scmp.eq.s32.totalorder %s21, 0
      %p198 = por %p196, %p197
      %p199 = scmp.ne.s32.totalorder %s191, %s193
      %p200 = scmp.eq.s32.totalorder %s26, 1
      %p201 = por %p199, %p200
      %p202 = scmp.ne.s32.totalorder %s193, %s194
      %p203 = scmp.eq.s32.totalorder %s26, 0
      %p204 = por %p202, %p203
      %p205 = scmp.ne.s32.totalorder %s193, %s194
      %p206 = scmp.eq.s32.totalorder %s27, 1
      %p207 = por %p205, %p206
      %p209 = scmp.ne.s32.totalorder %s194, %s208
      %p210 = scmp.eq.s32.totalorder %s27, 0
      %p211 = por %p209, %p210
      %s213 = sadd.s32 %s212, 1
      %p216 = scmp.eq.s32.totalorder %s21, 1
      %p217 = scmp.ne.s32.totalorder %s212, %s214
      %p218 = scmp.eq.s32.totalorder %s21, 0
      %p219 = por %p217, %p218
      %p220 = scmp.ne.s32.totalorder %s212, %s214
      %p221 = scmp.eq.s32.totalorder %s26, 1
      %p222 = por %p220, %p221
      %p223 = scmp.ne.s32.totalorder %s214, %s215
      %p224 = scmp.eq.s32.totalorder %s26, 0
      %p225 = por %p223, %p224
      %p226 = scmp.ne.s32.totalorder %s214, %s215
      %p227 = scmp.eq.s32.totalorder %s27, 1
      %p228 = por %p226, %p227
      %p230 = scmp.ne.s32.totalorder %s215, %s229
      %p231 = scmp.eq.s32.totalorder %s27, 0
      %p232 = por %p230, %p231
      %s234 = sadd.s32 %s233, 1
      %p237 = scmp.eq.s32.totalorder %s21, 1
      %p238 = scmp.ne.s32.totalorder %s233, %s235
      %p239 = scmp.eq.s32.totalorder %s21, 0
      %p240 = por %p238, %p239
      %p241 = scmp.ne.s32.totalorder %s233, %s235
      %p242 = scmp.eq.s32.totalorder %s26, 1
      %p243 = por %p241, %p242
      %p244 = scmp.ne.s32.totalorder %s235, %s236
      %p245 = scmp.eq.s32.totalorder %s26, 0
      %p246 = por %p244, %p245
      %p247 = scmp.ne.s32.totalorder %s235, %s236
      %p248 = scmp.eq.s32.totalorder %s27, 1
      %p249 = por %p247, %p248
      %p251 = scmp.ne.s32.totalorder %s236, %s250
      %p252 = scmp.eq.s32.totalorder %s27, 0
      %p253 = por %p251, %p252
      %s255 = sadd.s32 %s254, 1
      %p258 = scmp.eq.s32.totalorder %s21, 1
      %p259 = scmp.ne.s32.totalorder %s254, %s256
      %p260 = scmp.eq.s32.totalorder %s21, 0
      %p261 = por %p259, %p260
      %p262 = scmp.ne.s32.totalorder %s254, %s256
      %p263 = scmp.eq.s32.totalorder %s26, 1
      %p264 = por %p262, %p263
      %p265 = scmp.ne.s32.totalorder %s256, %s257
      %p266 = scmp.eq.s32.totalorder %s26, 0
      %p267 = por %p265, %p266
      %p268 = scmp.ne.s32.totalorder %s256, %s257
      %p269 = scmp.eq.s32.totalorder %s27, 1
      %p270 = por %p268, %p269
      %p272 = scmp.ne.s32.totalorder %s257, %s271
      %p273 = scmp.eq.s32.totalorder %s27, 0
      %p274 = por %p272, %p273
      %s275 = ssub.s32 %s21, %s28
      %p276 = scmp.eq.s32.totalorder %s275, 0
      %s278 = sadd.s32 %s277, 1
      %s279 = scalar_select %p276, %s277, %s278
      %p282 = pneg %p276
      %p283 = scmp.eq.s32.totalorder %s21, 1
      %p284 = por %p282, %p283
      %p285 = scmp.ne.s32.totalorder %s277, %s280
      %p286 = scmp.eq.s32.totalorder %s21, 0
      %p287 = por %p285, %p286
      %p288 = scmp.ne.s32.totalorder %s277, %s280
      %p289 = scmp.eq.s32.totalorder %s26, 1
      %p290 = por %p288, %p289
      %p291 = scmp.ne.s32.totalorder %s280, %s281
      %p292 = scmp.eq.s32.totalorder %s26, 0
      %p293 = por %p291, %p292
      %p294 = scmp.ne.s32.totalorder %s280, %s281
      %p295 = scmp.eq.s32.totalorder %s27, 1
      %p296 = por %p294, %p295
      %p298 = scmp.ne.s32.totalorder %s281, %s297
      %p299 = scmp.eq.s32.totalorder %s27, 0
      %p300 = por %p298, %p299
      %p301 = scmp.le.s32.totalorder 1, %s21
      %p302 = scmp.lt.s32.totalorder %s21, 3
      %p303 = pnand %p301, %p302
      %p304 = pneg %p303
      // Predicated region
      $region9: #{tpu_custom_call.1} parent=5 // pred_check
        _
      $region10: #{tpu_custom_call.1} parent=5 // pred_check_branch
        %306 = sbr.rel (%p303) target = $region12
      $region11: #{tpu_custom_call.1} parent=5 // pred_region
        %s307 = ssub.s32 %s21, 1
        // Predicated region
        $region13: #{tpu_custom_call.1} parent=11 // pred_check
          %p308 = pneg %p120
        $region14: #{tpu_custom_call.1} parent=11 // pred_check_branch
          %310 = sbr.rel (%p308) target = $region16
        $region15: #{tpu_custom_call.1} parent=11 // pred_region
          %s312 = ssub.s32 256, 256
          %313 = vsyncadd [#allocation3], %s312
          %s314 = sshll.u32 [#allocation2], 4
          %s315 = int_to_ptr.vmem [resolvable:$true] %s314
          %320 = dma.hbm_to_vmem [thread:$0]  %s3, 256, %s315, [#allocation3], 64, 64, 4
        $region16: #{tpu_custom_call.1} parent=11 // pred_fallthru
          _
        // Predicated region
        $region17: #{tpu_custom_call.1} parent=11 // pred_check
          %p321 = pneg %p141
        $region18: #{tpu_custom_call.1} parent=11 // pred_check_branch
          %323 = sbr.rel (%p321) target = $region20
        $region19: #{tpu_custom_call.1} parent=11 // pred_region
          _
        $region20: #{tpu_custom_call.1} parent=11 // pred_fallthru
          _
        // Predicated region
        $region21: #{tpu_custom_call.1} parent=11 // pred_check
          %p324 = pneg %p162
        $region22: #{tpu_custom_call.1} parent=11 // pred_check_branch
          %326 = sbr.rel (%p324) target = $region24
        $region23: #{tpu_custom_call.1} parent=11 // pred_region
          _
        $region24: #{tpu_custom_call.1} parent=11 // pred_fallthru
          _
        // Predicated region
        $region25: #{tpu_custom_call.1} parent=11 // pred_check
          %p327 = pneg %p183
        $region26: #{tpu_custom_call.1} parent=11 // pred_check_branch
          %329 = sbr.rel (%p327) target = $region28
        $region27: #{tpu_custom_call.1} parent=11 // pred_region
          _
        $region28: #{tpu_custom_call.1} parent=11 // pred_fallthru
          _
        // Predicated region
        $region29: #{tpu_custom_call.1} parent=11 // pred_check
          %p330 = pneg %p204
        $region30: #{tpu_custom_call.1} parent=11 // pred_check_branch
          %332 = sbr.rel (%p330) target = $region32
        $region31: #{tpu_custom_call.1} parent=11 // pred_region
          _
        $region32: #{tpu_custom_call.1} parent=11 // pred_fallthru
          _
        // Predicated region
        $region33: #{tpu_custom_call.1} parent=11 // pred_check
          %p333 = pneg %p225
        $region34: #{tpu_custom_call.1} parent=11 // pred_check_branch
          %335 = sbr.rel (%p333) target = $region36
        $region35: #{tpu_custom_call.1} parent=11 // pred_region
          _
        $region36: #{tpu_custom_call.1} parent=11 // pred_fallthru
          _
        // Predicated region
        $region37: #{tpu_custom_call.1} parent=11 // pred_check
          %p336 = pneg %p246
        $region38: #{tpu_custom_call.1} parent=11 // pred_check_branch
          %338 = sbr.rel (%p336) target = $region40
        $region39: #{tpu_custom_call.1} parent=11 // pred_region
          _
        $region40: #{tpu_custom_call.1} parent=11 // pred_fallthru
          _
        // Predicated region
        $region41: #{tpu_custom_call.1} parent=11 // pred_check
          %p339 = pneg %p267
        $region42: #{tpu_custom_call.1} parent=11 // pred_check_branch
          %341 = sbr.rel (%p339) target = $region44
        $region43: #{tpu_custom_call.1} parent=11 // pred_region
          _
        $region44: #{tpu_custom_call.1} parent=11 // pred_fallthru
          _
      $region12: #{tpu_custom_call.1} parent=5 // pred_fallthru
        _
      %p342 = scmp.lt.s32.totalorder %s21, 2
      // Predicated region
      $region45: #{tpu_custom_call.1} parent=5 // pred_check
        %p343 = pneg %p342
      $region46: #{tpu_custom_call.1} parent=5 // pred_check_branch
        %345 = sbr.rel (%p343) target = $region48
      $region47: #{tpu_custom_call.1} parent=5 // pred_region
        // Predicated region
        $region49: #{tpu_custom_call.1} parent=47 // pred_check
          %p346 = pneg %p41
        $region50: #{tpu_custom_call.1} parent=47 // pred_check_branch
          %348 = sbr.rel (%p346) target = $region52
        $region51: #{tpu_custom_call.1} parent=47 // pred_region
          %s349 = smul.u32 2, %s21
          %p350 = scmp.lt.s32.totalorder %s349, 3
          %s351 = scalar_select %p350, %s349, 3
          %s352 = smul.addr %s351, 4
          %s353 = scalar_lea.vmem %s0, %s352
          %s354 = smul.u32 2, %s21
        $region52: #{tpu_custom_call.1} parent=47 // pred_fallthru
          _
        // Predicated region
        $region53: #{tpu_custom_call.1} parent=47 // pred_check
          %p355 = pneg %p67
        $region54: #{tpu_custom_call.1} parent=47 // pred_check_branch
          %357 = sbr.rel (%p355) target = $region56
        $region55: #{tpu_custom_call.1} parent=47 // pred_region
          %s358 = smul.u32 2, %s21
          %p359 = scmp.lt.s32.totalorder %s358, 3
          %s360 = scalar_select %p359, %s358, 3
          %s361 = smul.addr %s360, 2
          %s362 = smul.addr %s361, 4
          %s363 = scalar_lea.vmem %s1, %s362
          %s364 = smul.u32 2, %s21
        $region56: #{tpu_custom_call.1} parent=47 // pred_fallthru
          _
        // Predicated region
        $region57: #{tpu_custom_call.1} parent=47 // pred_check
          %p365 = pneg %p93
        $region58: #{tpu_custom_call.1} parent=47 // pred_check_branch
          %367 = sbr.rel (%p365) target = $region60
        $region59: #{tpu_custom_call.1} parent=47 // pred_region
          %s368 = smul.u32 2, %s21
          %p369 = scmp.lt.s32.totalorder %s368, 3
          %s370 = scalar_select %p369, %s368, 3
          %s371 = smul.addr %s370, 2
          %s372 = smul.addr %s371, 4
          %s373 = scalar_lea.vmem %s2, %s372
          %s374 = smul.u32 2, %s21
        $region60: #{tpu_custom_call.1} parent=47 // pred_fallthru
          _
      $region48: #{tpu_custom_call.1} parent=5 // pred_fallthru
        _
      %p375 = scmp.le.s32.totalorder 1, %s21
      %p376 = scmp.lt.s32.totalorder %s21, 3
      %p377 = pnand %p375, %p376
      %p378 = pneg %p377
      // Predicated region
      $region61: #{tpu_custom_call.1} parent=5 // pred_check
        _
      $region62: #{tpu_custom_call.1} parent=5 // pred_check_branch
        %380 = sbr.rel (%p377) target = $region64
      $region63: #{tpu_custom_call.1} parent=5 // pred_region
        %s381 = ssub.s32 %s21, 1
        // Predicated region
        $region65: #{tpu_custom_call.1} parent=63 // pred_check
          %p382 = pneg %p120
        $region66: #{tpu_custom_call.1} parent=63 // pred_check_branch
          %384 = sbr.rel (%p382) target = $region68
        $region67: #{tpu_custom_call.1} parent=63 // pred_region
          %385 = dma.done [#allocation3], 256
        $region68: #{tpu_custom_call.1} parent=63 // pred_fallthru
          _
        %s386 = smul.u32 2, %s26
        %p387 = scmp.lt.s32.totalorder %s386, 3
        %s388 = scalar_select %p387, %s386, 3
        %s389 = smul.addr %s388, 4
        %s390 = scalar_lea.vmem %s0, %s389
        %p391 = pneg %p47
        %p392 = pneg %p44
        %s393 = smul.u32 2, %s26
        %p394 = scmp.lt.s32.totalorder %s393, 3
        %s395 = scalar_select %p394, %s393, 3
        %s396 = smul.addr %s395, 2
        %s397 = smul.addr %s396, 4
        %s398 = scalar_lea.vmem %s1, %s397
        %p399 = pneg %p73
        %p400 = pneg %p70
        %s401 = smul.u32 2, %s26
        %p402 = scmp.lt.s32.totalorder %s401, 3
        %s403 = scalar_select %p402, %s401, 3
        %s404 = smul.addr %s403, 2
        %s405 = smul.addr %s404, 4
        %s406 = scalar_lea.vmem %s2, %s405
        %p407 = pneg %p99
        %p408 = pneg %p96
        %p409 = pneg %p120
        %p410 = pneg %p117
        %p411 = pneg %p141
        %p412 = pneg %p138
        %p413 = pneg %p162
        %p414 = pneg %p159
        %p415 = pneg %p183
        %p416 = pneg %p180
        %p417 = pneg %p204
        %p418 = pneg %p201
        %p419 = pneg %p225
        %p420 = pneg %p222
        %p421 = pneg %p246
        %p422 = pneg %p243
        %p423 = pneg %p267
        %p424 = pneg %p264
        %p425 = pneg %p293
        %p426 = pneg %p290
        %s427 = sand.u32 %s280, 1
        %s428 = scalar_lea.sflag [#allocation4], %s427
        %s429 = sand.u32 %s280, 1
        %s430 = smul.addr %s429, 8
        %s431 = scalar_lea.vmem [#allocation5], %s430
        %s432 = smul.u32 2, %s26
        %p433 = scmp.lt.s32.totalorder %s432, 3
        %s434 = scalar_select %p433, %s432, 3
        %s435 = smul.addr %s434, 4
        %s436 = scalar_lea.vmem %s0, %s435
        %s437 = smul.u32 2, %s26
        %s438 = smul.u32 2, %s26
        %p439 = scmp.lt.s32.totalorder %s438, 3
        %s440 = scalar_select %p439, %s438, 3
        %s441 = smul.addr %s440, 2
        %s442 = smul.addr %s441, 4
        %s443 = scalar_lea.vmem %s1, %s442
        %s444 = smul.u32 2, %s26
        %s445 = smul.u32 2, %s26
        %p446 = scmp.lt.s32.totalorder %s445, 3
        %s447 = scalar_select %p446, %s445, 3
        %s448 = smul.addr %s447, 2
        %s449 = smul.addr %s448, 4
        %s450 = scalar_lea.vmem %s2, %s449
        %s451 = smul.u32 2, %s26
        %s452 = smul.u32 2, %s26
        %v454 = vld [vmem:[%s436] sm:$0xf]
        %v455 = vld [vmem:[%s436 + $0x4] sm:$0xf]
        %v456 = vld [vmem:[%s443] sm:$0xf]
        %v457 = vld [vmem:[%s443 + $0x4] sm:$0xf]
        %v458 = vld [vmem:[%s443 + $0x8] sm:$0xf]
        %v459 = vld [vmem:[%s443 + $0xc] sm:$0xf]
        %v460 = vld [vmem:[%s450] sm:$0xf]
        %v461 = vld [vmem:[%s450 + $0x4] sm:$0xf]
        %v462 = vld [vmem:[%s450 + $0x8] sm:$0xf]
        %v463 = vld [vmem:[%s450 + $0xc] sm:$0xf]
        %v464 = vld [vmem:[#allocation2] sm:$0xf]
        %v465 = vld [vmem:[#allocation2 + $0x4] sm:$0xf]
        %v466 = vld [vmem:[#allocation2 + $0x8] sm:$0xf]
        %v467 = vld [vmem:[#allocation2 + $0xc] sm:$0xf]
        %v468 = vld [vmem:[%s4] sm:$0x1]
        %v470 = vlaneseq
        %v471 = vshrl.u32 %v470, 7
        %v472 = vsub.s32 0, %v471
        %v473 = vrot.slane %v468, %v472
        %v477 = vunpack.c.l.b16 %v454
        %v478 = vunpack.c.l.b16 %v455
        %v479 = vpack.c.b16 %v478, %v477
        %v484 = vunpack.c.l.b16 %v464
        %v485 = vunpack.c.l.b16 %v465
        %v486 = vunpack.c.l.b16 %v466
        %v487 = vunpack.c.l.b16 %v467
        %v488 = vpack.c.b16 %v485, %v484
        %v489 = vpack.c.b16 %v487, %v486
        %vm492 = vcmask 261120
        %v494 = vsel %vm492, %v479, 0
        %496 = vmatprep.subr.bf16.mxu0 0
        %497 = vmatpush1.bf16.msra.mxu0 %v488
        %498 = vmatprep.subr.bf16.mxu0 0
        %499 = vmatpush1.bf16.msra.mxu0 %v489
        %500 = vmatprep.subr.bf16.mxu0 0
        %501 = vmatpush1.bf16.msra.mxu0 0
        %502 = vmatprep.subr.bf16.mxu0 0
        %503 = vmatpush1.bf16.msra.mxu0 0
        %504 = vmatprep.subr.bf16.mxu0 0
        %505 = vmatpush1.bf16.msra.mxu0 0
        %506 = vmatprep.subr.bf16.mxu0 0
        %507 = vmatpush1.bf16.msra.mxu0 0
        %508 = vmatprep.subr.bf16.mxu0 0
        %509 = vmatpush1.bf16.msra.mxu0 0
        %510 = vmatprep.subr.bf16.mxu0 0
        %511 = vmatpush1.bf16.msra.mxu0 0
        %512 = vmatprep.subr.bf16.mxu0 0
        %513 = vmatpush1.bf16.msra.mxu0 0
        %514 = vmatprep.subr.bf16.mxu0 0
        %515 = vmatpush1.bf16.msra.mxu0 0
        %516 = vmatprep.subr.bf16.mxu0 0
        %517 = vmatpush1.bf16.msra.mxu0 0
        %518 = vmatprep.subr.bf16.mxu0 0
        %519 = vmatpush1.bf16.msra.mxu0 0
        %520 = vmatprep.subr.bf16.mxu0 0
        %521 = vmatpush1.bf16.msra.mxu0 0
        %522 = vmatprep.subr.bf16.mxu0 0
        %523 = vmatpush1.bf16.msra.mxu0 0
        %524 = vmatprep.subr.bf16.mxu0 0
        %525 = vmatpush1.bf16.msra.mxu0 0
        %526 = vmatprep.subr.bf16.mxu0 0
        %527 = vmatpush1.bf16.msra.mxu0 0
        %528 = vmatprep.mubr.bf16.mxu0 0
        %529 = vmatmul.mubr.bf16.gmra.mrb[0].mxu0 %v494
        %v530 = vpop.f32.mrb[0].mxu0
        %v531 = vadd.f32 %v473, %v530
        %v532 = vpop.f32.mrb[0].mxu0
        %v533 = vpop.f32.mrb[0].mxu0
        %v534 = vadd.f32 %v473, %v533
        %v535 = vpop.f32.mrb[0].mxu0
        %536 = vdwg.mxu0
        %v537 = vld [vmem:[%s5] sm:$0xf]
        %v538 = vld [vmem:[%s5 + $0x4] sm:$0xf]
        %v539 = vld [vmem:[%s5 + $0x8] sm:$0xf]
        %v540 = vld [vmem:[%s5 + $0xc] sm:$0xf]
        %v541 = vld [vmem:[%s5 + $0x10] sm:$0xf]
        %v542 = vld [vmem:[%s5 + $0x14] sm:$0xf]
        %v543 = vld [vmem:[%s6] sm:$0x1]
        %v545 = vlaneseq
        %v546 = vshrl.u32 %v545, 7
        %v547 = vsub.s32 0, %v546
        %v548 = vrot.slane %v543, %v547
        %v554 = vunpack.c.l.b16 %v456
        %v555 = vunpack.c.l.b16 %v457
        %v556 = vunpack.c.l.b16 %v458
        %v557 = vunpack.c.l.b16 %v459
        %v558 = vpack.c.b16 %v555, %v554
        %v559 = vpack.c.b16 %v557, %v556
        %v566 = vunpack.c.l.b16 %v537
        %v567 = vunpack.c.l.b16 %v538
        %v568 = vunpack.c.l.b16 %v539
        %v569 = vunpack.c.l.b16 %v540
        %v570 = vunpack.c.l.b16 %v541
        %v571 = vunpack.c.l.b16 %v542
        %v572 = vpack.c.b16 %v567, %v566
        %v573 = vpack.c.b16 %v569, %v568
        %v574 = vpack.c.b16 %v571, %v570
        %vm578 = vcmask 392192
        %v580 = vsel %vm578, %v558, 0
        %v583 = vsel %vm578, %v559, 0
        %585 = vmatprep.subr.bf16.mxu0 0
        %586 = vmatpush1.bf16.msra.mxu0 %v572
        %587 = vmatprep.subr.bf16.mxu0 0
        %588 = vmatpush1.bf16.msra.mxu0 %v573
        %589 = vmatprep.subr.bf16.mxu0 0
        %590 = vmatpush1.bf16.msra.mxu0 %v574
        %591 = vmatprep.subr.bf16.mxu0 0
        %592 = vmatpush1.bf16.msra.mxu0 0
        %593 = vmatprep.subr.bf16.mxu0 0
        %594 = vmatpush1.bf16.msra.mxu0 0
        %595 = vmatprep.subr.bf16.mxu0 0
        %596 = vmatpush1.bf16.msra.mxu0 0
        %597 = vmatprep.subr.bf16.mxu0 0
        %598 = vmatpush1.bf16.msra.mxu0 0
        %599 = vmatprep.subr.bf16.mxu0 0
        %600 = vmatpush1.bf16.msra.mxu0 0
        %601 = vmatprep.subr.bf16.mxu0 0
        %602 = vmatpush1.bf16.msra.mxu0 0
        %603 = vmatprep.subr.bf16.mxu0 0
        %604 = vmatpush1.bf16.msra.mxu0 0
        %605 = vmatprep.subr.bf16.mxu0 0
        %606 = vmatpush1.bf16.msra.mxu0 0
        %607 = vmatprep.subr.bf16.mxu0 0
        %608 = vmatpush1.bf16.msra.mxu0 0
        %609 = vmatprep.subr.bf16.mxu0 0
        %610 = vmatpush1.bf16.msra.mxu0 0
        %611 = vmatprep.subr.bf16.mxu0 0
        %612 = vmatpush1.bf16.msra.mxu0 0
        %613 = vmatprep.subr.bf16.mxu0 0
        %614 = vmatpush1.bf16.msra.mxu0 0
        %615 = vmatprep.subr.bf16.mxu0 0
        %616 = vmatpush1.bf16.msra.mxu0 0
        %617 = vmatprep.mubr.bf16.mxu0 0
        %618 = vmatmul.mubr.bf16.gmra.mrb[0].mxu0 %v580
        %v619 = vpop.f32.mrb[0].mxu0
        %v620 = vadd.f32 %v548, %v619
        %v621 = vpop.f32.mrb[0].mxu0
        %v622 = vpop.f32.mrb[0].mxu0
        %v623 = vadd.f32 %v548, %v622
        %v624 = vpop.f32.mrb[0].mxu0
        %625 = vmatprep.mubr.bf16.mxu0 0
        %626 = vmatmul.mubr.bf16.gmra.mrb[0].mxu0 %v583
        %v627 = vpop.f32.mrb[0].mxu0
        %v628 = vadd.f32 %v548, %v627
        %v629 = vpop.f32.mrb[0].mxu0
        %v630 = vpop.f32.mrb[0].mxu0
        %v631 = vadd.f32 %v548, %v630
        %v632 = vpop.f32.mrb[0].mxu0
        %633 = vdwg.mxu0
        %v634 = vld [vmem:[%s7] sm:$0xf]
        %v635 = vld [vmem:[%s7 + $0x4] sm:$0xf]
        %v636 = vld [vmem:[%s7 + $0x8] sm:$0xf]
        %v637 = vld [vmem:[%s7 + $0xc] sm:$0xf]
        %v638 = vld [vmem:[%s7 + $0x10] sm:$0xf]
        %v639 = vld [vmem:[%s7 + $0x14] sm:$0xf]
        %v640 = vld [vmem:[%s8] sm:$0x1]
        %v642 = vlaneseq
        %v643 = vshrl.u32 %v642, 7
        %v644 = vsub.s32 0, %v643
        %v645 = vrot.slane %v640, %v644
        %v651 = vunpack.c.l.b16 %v460
        %v652 = vunpack.c.l.b16 %v461
        %v653 = vunpack.c.l.b16 %v462
        %v654 = vunpack.c.l.b16 %v463
        %v655 = vpack.c.b16 %v652, %v651
        %v656 = vpack.c.b16 %v654, %v653
        %v663 = vunpack.c.l.b16 %v634
        %v664 = vunpack.c.l.b16 %v635
        %v665 = vunpack.c.l.b16 %v636
        %v666 = vunpack.c.l.b16 %v637
        %v667 = vunpack.c.l.b16 %v638
        %v668 = vunpack.c.l.b16 %v639
        %v669 = vpack.c.b16 %v664, %v663
        %v670 = vpack.c.b16 %v666, %v665
        %v671 = vpack.c.b16 %v668, %v667
        %v676 = vsel %vm578, %v655, 0
        %v679 = vsel %vm578, %v656, 0
        %681 = vmatprep.subr.bf16.mxu0 0
        %682 = vmatpush1.bf16.msra.mxu0 %v669
        %683 = vmatprep.subr.bf16.mxu0 0
        %684 = vmatpush1.bf16.msra.mxu0 %v670
        %685 = vmatprep.subr.bf16.mxu0 0
        %686 = vmatpush1.bf16.msra.mxu0 %v671
        %687 = vmatprep.subr.bf16.mxu0 0
        %688 = vmatpush1.bf16.msra.mxu0 0
        %689 = vmatprep.subr.bf16.mxu0 0
        %690 = vmatpush1.bf16.msra.mxu0 0
        %691 = vmatprep.subr.bf16.mxu0 0
        %692 = vmatpush1.bf16.msra.mxu0 0
        %693 = vmatprep.subr.bf16.mxu0 0
        %694 = vmatpush1.bf16.msra.mxu0 0
        %695 = vmatprep.subr.bf16.mxu0 0
        %696 = vmatpush1.bf16.msra.mxu0 0
        %697 = vmatprep.subr.bf16.mxu0 0
        %698 = vmatpush1.bf16.msra.mxu0 0
        %699 = vmatprep.subr.bf16.mxu0 0
        %700 = vmatpush1.bf16.msra.mxu0 0
        %701 = vmatprep.subr.bf16.mxu0 0
        %702 = vmatpush1.bf16.msra.mxu0 0
        %703 = vmatprep.subr.bf16.mxu0 0
        %704 = vmatpush1.bf16.msra.mxu0 0
        %705 = vmatprep.subr.bf16.mxu0 0
        %706 = vmatpush1.bf16.msra.mxu0 0
        %707 = vmatprep.subr.bf16.mxu0 0
        %708 = vmatpush1.bf16.msra.mxu0 0
        %709 = vmatprep.subr.bf16.mxu0 0
        %710 = vmatpush1.bf16.msra.mxu0 0
        %711 = vmatprep.subr.bf16.mxu0 0
        %712 = vmatpush1.bf16.msra.mxu0 0
        %713 = vmatprep.mubr.bf16.mxu0 0
        %714 = vmatmul.mubr.bf16.gmra.mrb[0].mxu0 %v676
        %v715 = vpop.f32.mrb[0].mxu0
        %v716 = vadd.f32 %v645, %v715
        %v717 = vpop.f32.mrb[0].mxu0
        %v718 = vpop.f32.mrb[0].mxu0
        %v719 = vadd.f32 %v645, %v718
        %v720 = vpop.f32.mrb[0].mxu0
        %721 = vmatprep.mubr.bf16.mxu0 0
        %722 = vmatmul.mubr.bf16.gmra.mrb[0].mxu0 %v679
        %v723 = vpop.f32.mrb[0].mxu0
        %v724 = vadd.f32 %v645, %v723
        %v725 = vpop.f32.mrb[0].mxu0
        %v726 = vpop.f32.mrb[0].mxu0
        %v727 = vadd.f32 %v645, %v726
        %v728 = vpop.f32.mrb[0].mxu0
        %729 = vdwg.mxu0
        %732 = vrot.lane.b32.xlu0 %v531, 120
        %v733 = vpop.permute.xlu0 %732
        %734 = vrot.lane.b32.xlu0 %v534, 120
        %v735 = vpop.permute.xlu0 %734
        %738 = vrot.lane.b32.xlu0 %v531, 112
        %v739 = vpop.permute.xlu0 %738
        %740 = vrot.lane.b32.xlu0 %v534, 112
        %v741 = vpop.permute.xlu0 %740
        %744 = vrot.lane.b32.xlu0 %v531, 104
        %v745 = vpop.permute.xlu0 %744
        %746 = vrot.lane.b32.xlu0 %v534, 104
        %v747 = vpop.permute.xlu0 %746
        %v750 = vpack.c.bf16 %v531, %v531
        %v751 = vpack.c.bf16 %v534, %v534
        %v752 = vpack.c.bf16 %v733, %v733
        %v753 = vpack.c.bf16 %v735, %v735
        %v754 = vpack.c.bf16 %v739, %v739
        %v755 = vpack.c.bf16 %v741, %v741
        %v756 = vpack.c.bf16 %v745, %v745
        %v757 = vpack.c.bf16 %v747, %v747
        %762 = vrot.lane.b32.xlu0 %v620, 120
        %v763 = vpop.permute.xlu0 %762
        %764 = vrot.lane.b32.xlu0 %v623, 120
        %v765 = vpop.permute.xlu0 %764
        %766 = vrot.lane.b32.xlu0 %v628, 120
        %v767 = vpop.permute.xlu0 %766
        %768 = vrot.lane.b32.xlu0 %v631, 120
        %v769 = vpop.permute.xlu0 %768
        %774 = vrot.lane.b32.xlu0 %v620, 112
        %v775 = vpop.permute.xlu0 %774
        %776 = vrot.lane.b32.xlu0 %v623, 112
        %v777 = vpop.permute.xlu0 %776
        %778 = vrot.lane.b32.xlu0 %v628, 112
        %v779 = vpop.permute.xlu0 %778
        %780 = vrot.lane.b32.xlu0 %v631, 112
        %v781 = vpop.permute.xlu0 %780
        %786 = vrot.lane.b32.xlu0 %v620, 104
        %v787 = vpop.permute.xlu0 %786
        %788 = vrot.lane.b32.xlu0 %v623, 104
        %v789 = vpop.permute.xlu0 %788
        %790 = vrot.lane.b32.xlu0 %v628, 104
        %v791 = vpop.permute.xlu0 %790
        %792 = vrot.lane.b32.xlu0 %v631, 104
        %v793 = vpop.permute.xlu0 %792
        %v798 = vpack.c.bf16 %v623, %v620
        %v799 = vpack.c.bf16 %v631, %v628
        %v800 = vpack.c.bf16 %v765, %v763
        %v801 = vpack.c.bf16 %v769, %v767
        %v802 = vpack.c.bf16 %v777, %v775
        %v803 = vpack.c.bf16 %v781, %v779
        %v804 = vpack.c.bf16 %v789, %v787
        %v805 = vpack.c.bf16 %v793, %v791
        %810 = vrot.lane.b32.xlu0 %v716, 120
        %v811 = vpop.permute.xlu0 %810
        %812 = vrot.lane.b32.xlu0 %v719, 120
        %v813 = vpop.permute.xlu0 %812
        %814 = vrot.lane.b32.xlu0 %v724, 120
        %v815 = vpop.permute.xlu0 %814
        %816 = vrot.lane.b32.xlu0 %v727, 120
        %v817 = vpop.permute.xlu0 %816
        %822 = vrot.lane.b32.xlu0 %v716, 112
        %v823 = vpop.permute.xlu0 %822
        %824 = vrot.lane.b32.xlu0 %v719, 112
        %v825 = vpop.permute.xlu0 %824
        %826 = vrot.lane.b32.xlu0 %v724, 112
        %v827 = vpop.permute.xlu0 %826
        %828 = vrot.lane.b32.xlu0 %v727, 112
        %v829 = vpop.permute.xlu0 %828
        %834 = vrot.lane.b32.xlu0 %v716, 104
        %v835 = vpop.permute.xlu0 %834
        %836 = vrot.lane.b32.xlu0 %v719, 104
        %v837 = vpop.permute.xlu0 %836
        %838 = vrot.lane.b32.xlu0 %v724, 104
        %v839 = vpop.permute.xlu0 %838
        %840 = vrot.lane.b32.xlu0 %v727, 104
        %v841 = vpop.permute.xlu0 %840
        %v846 = vpack.c.bf16 %v719, %v716
        %v847 = vpack.c.bf16 %v727, %v724
        %v848 = vpack.c.bf16 %v813, %v811
        %v849 = vpack.c.bf16 %v817, %v815
        %v850 = vpack.c.bf16 %v825, %v823
        %v851 = vpack.c.bf16 %v829, %v827
        %v852 = vpack.c.bf16 %v837, %v835
        %v853 = vpack.c.bf16 %v841, %v839
        %vm854 = vcmask 64512
        %v856 = vsel %vm854, %v750, 0
        %v859 = vsel %vm854, %v798, 0
        %861 = vmatprep.subr.bf16.mxu0 0
        %862 = vmatpush1.bf16.xpose.msra.mxu0 %v859
        %863 = vmatprep.subr.bf16.mxu0 0
        %864 = vmatpush1.bf16.xpose.msra.mxu0 0
        %865 = vmatprep.subr.bf16.mxu0 0
        %866 = vmatpush1.bf16.xpose.msra.mxu0 0
        %867 = vmatprep.subr.bf16.mxu0 0
        %868 = vmatpush1.bf16.xpose.msra.mxu0 0
        %869 = vmatprep.subr.bf16.mxu0 0
        %870 = vmatpush1.bf16.xpose.msra.mxu0 0
        %871 = vmatprep.subr.bf16.mxu0 0
        %872 = vmatpush1.bf16.xpose.msra.mxu0 0
        %873 = vmatprep.subr.bf16.mxu0 0
        %874 = vmatpush1.bf16.xpose.msra.mxu0 0
        %875 = vmatprep.subr.bf16.mxu0 0
        %876 = vmatpush1.bf16.xpose.msra.mxu0 0
        %877 = vmatprep.subr.bf16.mxu0 0
        %878 = vmatpush1.bf16.xpose.msra.mxu0 0
        %879 = vmatprep.subr.bf16.mxu0 0
        %880 = vmatpush1.bf16.xpose.msra.mxu0 0
        %881 = vmatprep.subr.bf16.mxu0 0
        %882 = vmatpush1.bf16.xpose.msra.mxu0 0
        %883 = vmatprep.subr.bf16.mxu0 0
        %884 = vmatpush1.bf16.xpose.msra.mxu0 0
        %885 = vmatprep.subr.bf16.mxu0 0
        %886 = vmatpush1.bf16.xpose.msra.mxu0 0
        %887 = vmatprep.subr.bf16.mxu0 0
        %888 = vmatpush1.bf16.xpose.msra.mxu0 0
        %889 = vmatprep.subr.bf16.mxu0 0
        %890 = vmatpush1.bf16.xpose.msra.mxu0 0
        %891 = vmatprep.subr.bf16.mxu0 0
        %892 = vmatpush1.bf16.xpose.msra.mxu0 0
        %893 = vmatprep.mubr.bf16.mxu0 0
        %894 = vmatmul.mubr.bf16.gmra.mrb[0].mxu0 %v856
        %v895 = vpop.f32.mrb[0].mxu0
        %v896 = vadd.f32 0.0, %v895
        %v897 = vpop.f32.mrb[0].mxu0
        %v898 = vpop.f32.mrb[0].mxu0
        %v899 = vpop.f32.mrb[0].mxu0
        %900 = vdwg.mxu0
        %v902 = vsel %vm854, %v751, 0
        %v905 = vsel %vm854, %v799, 0
        %907 = vmatprep.subr.bf16.mxu0 0
        %908 = vmatpush1.bf16.xpose.msra.mxu0 %v905
        %909 = vmatprep.subr.bf16.mxu0 0
        %910 = vmatpush1.bf16.xpose.msra.mxu0 0
        %911 = vmatprep.subr.bf16.mxu0 0
        %912 = vmatpush1.bf16.xpose.msra.mxu0 0
        %913 = vmatprep.subr.bf16.mxu0 0
        %914 = vmatpush1.bf16.xpose.msra.mxu0 0
        %915 = vmatprep.subr.bf16.mxu0 0
        %916 = vmatpush1.bf16.xpose.msra.mxu0 0
        %917 = vmatprep.subr.bf16.mxu0 0
        %918 = vmatpush1.bf16.xpose.msra.mxu0 0
        %919 = vmatprep.subr.bf16.mxu0 0
        %920 = vmatpush1.bf16.xpose.msra.mxu0 0
        %921 = vmatprep.subr.bf16.mxu0 0
        %922 = vmatpush1.bf16.xpose.msra.mxu0 0
        %923 = vmatprep.subr.bf16.mxu0 0
        %924 = vmatpush1.bf16.xpose.msra.mxu0 0
        %925 = vmatprep.subr.bf16.mxu0 0
        %926 = vmatpush1.bf16.xpose.msra.mxu0 0
        %927 = vmatprep.subr.bf16.mxu0 0
        %928 = vmatpush1.bf16.xpose.msra.mxu0 0
        %929 = vmatprep.subr.bf16.mxu0 0
        %930 = vmatpush1.bf16.xpose.msra.mxu0 0
        %931 = vmatprep.subr.bf16.mxu0 0
        %932 = vmatpush1.bf16.xpose.msra.mxu0 0
        %933 = vmatprep.subr.bf16.mxu0 0
        %934 = vmatpush1.bf16.xpose.msra.mxu0 0
        %935 = vmatprep.subr.bf16.mxu0 0
        %936 = vmatpush1.bf16.xpose.msra.mxu0 0
        %937 = vmatprep.subr.bf16.mxu0 0
        %938 = vmatpush1.bf16.xpose.msra.mxu0 0
        %939 = vmatprep.mubr.bf16.mxu0 0
        %940 = vmatmul.mubr.bf16.gmra.mrb[0].mxu0 %v902
        %v941 = vpop.f32.mrb[0].mxu0
        %v942 = vadd.f32 0.0, %v941
        %v943 = vpop.f32.mrb[0].mxu0
        %v944 = vpop.f32.mrb[0].mxu0
        %v945 = vpop.f32.mrb[0].mxu0
        %946 = vdwg.mxu0
        %v948 = vsel %vm854, %v752, 0
        %v951 = vsel %vm854, %v800, 0
        %953 = vmatprep.subr.bf16.mxu0 0
        %954 = vmatpush1.bf16.xpose.msra.mxu0 %v951
        %955 = vmatprep.subr.bf16.mxu0 0
        %956 = vmatpush1.bf16.xpose.msra.mxu0 0
        %957 = vmatprep.subr.bf16.mxu0 0
        %958 = vmatpush1.bf16.xpose.msra.mxu0 0
        %959 = vmatprep.subr.bf16.mxu0 0
        %960 = vmatpush1.bf16.xpose.msra.mxu0 0
        %961 = vmatprep.subr.bf16.mxu0 0
        %962 = vmatpush1.bf16.xpose.msra.mxu0 0
        %963 = vmatprep.subr.bf16.mxu0 0
        %964 = vmatpush1.bf16.xpose.msra.mxu0 0
        %965 = vmatprep.subr.bf16.mxu0 0
        %966 = vmatpush1.bf16.xpose.msra.mxu0 0
        %967 = vmatprep.subr.bf16.mxu0 0
        %968 = vmatpush1.bf16.xpose.msra.mxu0 0
        %969 = vmatprep.subr.bf16.mxu0 0
        %970 = vmatpush1.bf16.xpose.msra.mxu0 0
        %971 = vmatprep.subr.bf16.mxu0 0
        %972 = vmatpush1.bf16.xpose.msra.mxu0 0
        %973 = vmatprep.subr.bf16.mxu0 0
        %974 = vmatpush1.bf16.xpose.msra.mxu0 0
        %975 = vmatprep.subr.bf16.mxu0 0
        %976 = vmatpush1.bf16.xpose.msra.mxu0 0
        %977 = vmatprep.subr.bf16.mxu0 0
        %978 = vmatpush1.bf16.xpose.msra.mxu0 0
        %979 = vmatprep.subr.bf16.mxu0 0
        %980 = vmatpush1.bf16.xpose.msra.mxu0 0
        %981 = vmatprep.subr.bf16.mxu0 0
        %982 = vmatpush1.bf16.xpose.msra.mxu0 0
        %983 = vmatprep.subr.bf16.mxu0 0
        %984 = vmatpush1.bf16.xpose.msra.mxu0 0
        %985 = vmatprep.mubr.bf16.mxu0 0
        %986 = vmatmul.mubr.bf16.gmra.mrb[0].mxu0 %v948
        %v987 = vpop.f32.mrb[0].mxu0
        %v988 = vadd.f32 0.0, %v987
        %v989 = vpop.f32.mrb[0].mxu0
        %v990 = vpop.f32.mrb[0].mxu0
        %v991 = vpop.f32.mrb[0].mxu0
        %992 = vdwg.mxu0
        %v994 = vsel %vm854, %v753, 0
        %v997 = vsel %vm854, %v801, 0
        %999 = vmatprep.subr.bf16.mxu0 0
        %1000 = vmatpush1.bf16.xpose.msra.mxu0 %v997
        %1001 = vmatprep.subr.bf16.mxu0 0
        %1002 = vmatpush1.bf16.xpose.msra.mxu0 0
        %1003 = vmatprep.subr.bf16.mxu0 0
        %1004 = vmatpush1.bf16.xpose.msra.mxu0 0
        %1005 = vmatprep.subr.bf16.mxu0 0
        %1006 = vmatpush1.bf16.xpose.msra.mxu0 0
        %1007 = vmatprep.subr.bf16.mxu0 0
        %1008 = vmatpush1.bf16.xpose.msra.mxu0 0
        %1009 = vmatprep.subr.bf16.mxu0 0
        %1010 = vmatpush1.bf16.xpose.msra.mxu0 0
        %1011 = vmatprep.subr.bf16.mxu0 0
        %1012 = vmatpush1.bf16.xpose.msra.mxu0 0
        %1013 = vmatprep.subr.bf16.mxu0 0
        %1014 = vmatpush1.bf16.xpose.msra.mxu0 0
        %1015 = vmatprep.subr.bf16.mxu0 0
        %1016 = vmatpush1.bf16.xpose.msra.mxu0 0
        %1017 = vmatprep.subr.bf16.mxu0 0
        %1018 = vmatpush1.bf16.xpose.msra.mxu0 0
        %1019 = vmatprep.subr.bf16.mxu0 0
        %1020 = vmatpush1.bf16.xpose.msra.mxu0 0
        %1021 = vmatprep.subr.bf16.mxu0 0
        %1022 = vmatpush1.bf16.xpose.msra.mxu0 0
        %1023 = vmatprep.subr.bf16.mxu0 0
        %1024 = vmatpush1.bf16.xpose.msra.mxu0 0
        %1025 = vmatprep.subr.bf16.mxu0 0
        %1026 = vmatpush1.bf16.xpose.msra.mxu0 0
        %1027 = vmatprep.subr.bf16.mxu0 0
        %1028 = vmatpush1.bf16.xpose.msra.mxu0 0
        %1029 = vmatprep.subr.bf16.mxu0 0
        %1030 = vmatpush1.bf16.xpose.msra.mxu0 0
        %1031 = vmatprep.mubr.bf16.mxu0 0
        %1032 = vmatmul.mubr.bf16.gmra.mrb[0].mxu0 %v994
        %v1033 = vpop.f32.mrb[0].mxu0
        %v1034 = vadd.f32 0.0, %v1033
        %v1035 = vpop.f32.mrb[0].mxu0
        %v1036 = vpop.f32.mrb[0].mxu0
        %v1037 = vpop.f32.mrb[0].mxu0
        %1038 = vdwg.mxu0
        %v1040 = vsel %vm854, %v754, 0
        %v1043 = vsel %vm854, %v802, 0
        %1045 = vmatprep.subr.bf16.mxu0 0
        %1046 = vmatpush1.bf16.xpose.msra.mxu0 %v1043
        %1047 = vmatprep.subr.bf16.mxu0 0
        %1048 = vmatpush1.bf16.xpose.msra.mxu0 0
        %1049 = vmatprep.subr.bf16.mxu0 0
        %1050 = vmatpush1.bf16.xpose.msra.mxu0 0
        %1051 = vmatprep.subr.bf16.mxu0 0
        %1052 = vmatpush1.bf16.xpose.msra.mxu0 0
        %1053 = vmatprep.subr.bf16.mxu0 0
        %1054 = vmatpush1.bf16.xpose.msra.mxu0 0
        %1055 = vmatprep.subr.bf16.mxu0 0
        %1056 = vmatpush1.bf16.xpose.msra.mxu0 0
        %1057 = vmatprep.subr.bf16.mxu0 0
        %1058 = vmatpush1.bf16.xpose.msra.mxu0 0
        %1059 = vmatprep.subr.bf16.mxu0 0
        %1060 = vmatpush1.bf16.xpose.msra.mxu0 0
        %1061 = vmatprep.subr.bf16.mxu0 0
        %1062 = vmatpush1.bf16.xpose.msra.mxu0 0
        %1063 = vmatprep.subr.bf16.mxu0 0
        %1064 = vmatpush1.bf16.xpose.msra.mxu0 0
        %1065 = vmatprep.subr.bf16.mxu0 0
        %1066 = vmatpush1.bf16.xpose.msra.mxu0 0
        %1067 = vmatprep.subr.bf16.mxu0 0
        %1068 = vmatpush1.bf16.xpose.msra.mxu0 0
        %1069 = vmatprep.subr.bf16.mxu0 0
        %1070 = vmatpush1.bf16.xpose.msra.mxu0 0
        %1071 = vmatprep.subr.bf16.mxu0 0
        %1072 = vmatpush1.bf16.xpose.msra.mxu0 0
        %1073 = vmatprep.subr.bf16.mxu0 0
        %1074 = vmatpush1.bf16.xpose.msra.mxu0 0
        %1075 = vmatprep.subr.bf16.mxu0 0
        %1076 = vmatpush1.bf16.xpose.msra.mxu0 0
        %1077 = vmatprep.mubr.bf16.mxu0 0
        %1078 = vmatmul.mubr.bf16.gmra.mrb[0].mxu0 %v1040
        %v1079 = vpop.f32.mrb[0].mxu0
        %v1080 = vadd.f32 0.0, %v1079
        %v1081 = vpop.f32.mrb[0].mxu0
        %v1082 = vpop.f32.mrb[0].mxu0
        %v1083 = vpop.f32.mrb[0].mxu0
        %1084 = vdwg.mxu0
        %v1086 = vsel %vm854, %v755, 0
        %v1089 = vsel %vm854, %v803, 0
        %1091 = vmatprep.subr.bf16.mxu0 0
        %1092 = vmatpush1.bf16.xpose.msra.mxu0 %v1089
        %1093 = vmatprep.subr.bf16.mxu0 0
        %1094 = vmatpush1.bf16.xpose.msra.mxu0 0
        %1095 = vmatprep.subr.bf16.mxu0 0
        %1096 = vmatpush1.bf16.xpose.msra.mxu0 0
        %1097 = vmatprep.subr.bf16.mxu0 0
        %1098 = vmatpush1.bf16.xpose.msra.mxu0 0
        %1099 = vmatprep.subr.bf16.mxu0 0
        %1100 = vmatpush1.bf16.xpose.msra.mxu0 0
        %1101 = vmatprep.subr.bf16.mxu0 0
        %1102 = vmatpush1.bf16.xpose.msra.mxu0 0
        %1103 = vmatprep.subr.bf16.mxu0 0
        %1104 = vmatpush1.bf16.xpose.msra.mxu0 0
        %1105 = vmatprep.subr.bf16.mxu0 0
        %1106 = vmatpush1.bf16.xpose.msra.mxu0 0
        %1107 = vmatprep.subr.bf16.mxu0 0
        %1108 = vmatpush1.bf16.xpose.msra.mxu0 0
        %1109 = vmatprep.subr.bf16.mxu0 0
        %1110 = vmatpush1.bf16.xpose.msra.mxu0 0
        %1111 = vmatprep.subr.bf16.mxu0 0
        %1112 = vmatpush1.bf16.xpose.msra.mxu0 0
        %1113 = vmatprep.subr.bf16.mxu0 0
        %1114 = vmatpush1.bf16.xpose.msra.mxu0 0
        %1115 = vmatprep.subr.bf16.mxu0 0
        %1116 = vmatpush1.bf16.xpose.msra.mxu0 0
        %1117 = vmatprep.subr.bf16.mxu0 0
        %1118 = vmatpush1.bf16.xpose.msra.mxu0 0
        %1119 = vmatprep.subr.bf16.mxu0 0
        %1120 = vmatpush1.bf16.xpose.msra.mxu0 0
        %1121 = vmatprep.subr.bf16.mxu0 0
        %1122 = vmatpush1.bf16.xpose.msra.mxu0 0
        %1123 = vmatprep.mubr.bf16.mxu0 0
        %1124 = vmatmul.mubr.bf16.gmra.mrb[0].mxu0 %v1086
        %v1125 = vpop.f32.mrb[0].mxu0
        %v1126 = vadd.f32 0.0, %v1125
        %v1127 = vpop.f32.mrb[0].mxu0
        %v1128 = vpop.f32.mrb[0].mxu0
        %v1129 = vpop.f32.mrb[0].mxu0
        %1130 = vdwg.mxu0
        %v1132 = vsel %vm854, %v756, 0
        %v1135 = vsel %vm854, %v804, 0
        %1137 = vmatprep.subr.bf16.mxu0 0
        %1138 = vmatpush1.bf16.xpose.msra.mxu0 %v1135
        %1139 = vmatprep.subr.bf16.mxu0 0
        %1140 = vmatpush1.bf16.xpose.msra.mxu0 0
        %1141 = vmatprep.subr.bf16.mxu0 0
        %1142 = vmatpush1.bf16.xpose.msra.mxu0 0
        %1143 = vmatprep.subr.bf16.mxu0 0
        %1144 = vmatpush1.bf16.xpose.msra.mxu0 0
        %1145 = vmatprep.subr.bf16.mxu0 0
        %1146 = vmatpush1.bf16.xpose.msra.mxu0 0
        %1147 = vmatprep.subr.bf16.mxu0 0
        %1148 = vmatpush1.bf16.xpose.msra.mxu0 0
        %1149 = vmatprep.subr.bf16.mxu0 0
        %1150 = vmatpush1.bf16.xpose.msra.mxu0 0
        %1151 = vmatprep.subr.bf16.mxu0 0
        %1152 = vmatpush1.bf16.xpose.msra.mxu0 0
        %1153 = vmatprep.subr.bf16.mxu0 0
        %1154 = vmatpush1.bf16.xpose.msra.mxu0 0
        %1155 = vmatprep.subr.bf16.mxu0 0
        %1156 = vmatpush1.bf16.xpose.msra.mxu0 0
        %1157 = vmatprep.subr.bf16.mxu0 0
        %1158 = vmatpush1.bf16.xpose.msra.mxu0 0
        %1159 = vmatprep.subr.bf16.mxu0 0
        %1160 = vmatpush1.bf16.xpose.msra.mxu0 0
        %1161 = vmatprep.subr.bf16.mxu0 0
        %1162 = vmatpush1.bf16.xpose.msra.mxu0 0
        %1163 = vmatprep.subr.bf16.mxu0 0
        %1164 = vmatpush1.bf16.xpose.msra.mxu0 0
        %1165 = vmatprep.subr.bf16.mxu0 0
        %1166 = vmatpush1.bf16.xpose.msra.mxu0 0
        %1167 = vmatprep.subr.bf16.mxu0 0
        %1168 = vmatpush1.bf16.xpose.msra.mxu0 0
        %1169 = vmatprep.mubr.bf16.mxu0 0
        %1170 = vmatmul.mubr.bf16.gmra.mrb[0].mxu0 %v1132
        %v1171 = vpop.f32.mrb[0].mxu0
        %v1172 = vadd.f32 0.0, %v1171
        %v1173 = vpop.f32.mrb[0].mxu0
        %v1174 = vpop.f32.mrb[0].mxu0
        %v1175 = vpop.f32.mrb[0].mxu0
        %1176 = vdwg.mxu0
        %v1178 = vsel %vm854, %v757, 0
        %v1181 = vsel %vm854, %v805, 0
        %1183 = vmatprep.subr.bf16.mxu0 0
        %1184 = vmatpush1.bf16.xpose.msra.mxu0 %v1181
        %1185 = vmatprep.subr.bf16.mxu0 0
        %1186 = vmatpush1.bf16.xpose.msra.mxu0 0
        %1187 = vmatprep.subr.bf16.mxu0 0
        %1188 = vmatpush1.bf16.xpose.msra.mxu0 0
        %1189 = vmatprep.subr.bf16.mxu0 0
        %1190 = vmatpush1.bf16.xpose.msra.mxu0 0
        %1191 = vmatprep.subr.bf16.mxu0 0
        %1192 = vmatpush1.bf16.xpose.msra.mxu0 0
        %1193 = vmatprep.subr.bf16.mxu0 0
        %1194 = vmatpush1.bf16.xpose.msra.mxu0 0
        %1195 = vmatprep.subr.bf16.mxu0 0
        %1196 = vmatpush1.bf16.xpose.msra.mxu0 0
        %1197 = vmatprep.subr.bf16.mxu0 0
        %1198 = vmatpush1.bf16.xpose.msra.mxu0 0
        %1199 = vmatprep.subr.bf16.mxu0 0
        %1200 = vmatpush1.bf16.xpose.msra.mxu0 0
        %1201 = vmatprep.subr.bf16.mxu0 0
        %1202 = vmatpush1.bf16.xpose.msra.mxu0 0
        %1203 = vmatprep.subr.bf16.mxu0 0
        %1204 = vmatpush1.bf16.xpose.msra.mxu0 0
        %1205 = vmatprep.subr.bf16.mxu0 0
        %1206 = vmatpush1.bf16.xpose.msra.mxu0 0
        %1207 = vmatprep.subr.bf16.mxu0 0
        %1208 = vmatpush1.bf16.xpose.msra.mxu0 0
        %1209 = vmatprep.subr.bf16.mxu0 0
        %1210 = vmatpush1.bf16.xpose.msra.mxu0 0
        %1211 = vmatprep.subr.bf16.mxu0 0
        %1212 = vmatpush1.bf16.xpose.msra.mxu0 0
        %1213 = vmatprep.subr.bf16.mxu0 0
        %1214 = vmatpush1.bf16.xpose.msra.mxu0 0
        %1215 = vmatprep.mubr.bf16.mxu0 0
        %1216 = vmatmul.mubr.bf16.gmra.mrb[0].mxu0 %v1178
        %v1217 = vpop.f32.mrb[0].mxu0
        %v1218 = vadd.f32 0.0, %v1217
        %v1219 = vpop.f32.mrb[0].mxu0
        %v1220 = vpop.f32.mrb[0].mxu0
        %v1221 = vpop.f32.mrb[0].mxu0
        %1222 = vdwg.mxu0
        %vm1223 = vcmask 130048
        %v1224 = vsel %vm1223, %v896, -inf
        %1225 = vmax.xlane.f32.xlu0 %v1224
        %v1226 = vpop.xlane.xlu0 %1225
        %v1227 = vsel %vm1223, %v942, -inf
        %1228 = vmax.xlane.f32.xlu0 %v1227
        %v1229 = vpop.xlane.xlu0 %1228
        %v1230 = vsel %vm1223, %v988, -inf
        %1231 = vmax.xlane.f32.xlu0 %v1230
        %v1232 = vpop.xlane.xlu0 %1231
        %v1233 = vsel %vm1223, %v1034, -inf
        %1234 = vmax.xlane.f32.xlu0 %v1233
        %v1235 = vpop.xlane.xlu0 %1234
        %v1236 = vsel %vm1223, %v1080, -inf
        %1237 = vmax.xlane.f32.xlu0 %v1236
        %v1238 = vpop.xlane.xlu0 %1237
        %v1239 = vsel %vm1223, %v1126, -inf
        %1240 = vmax.xlane.f32.xlu0 %v1239
        %v1241 = vpop.xlane.xlu0 %1240
        %v1242 = vsel %vm1223, %v1172, -inf
        %1243 = vmax.xlane.f32.xlu0 %v1242
        %v1244 = vpop.xlane.xlu0 %1243
        %v1245 = vsel %vm1223, %v1218, -inf
        %1246 = vmax.xlane.f32.xlu0 %v1245
        %v1247 = vpop.xlane.xlu0 %1246
        %v1248 = vsub.f32 %v896, %v1226
        %v1249 = vsub.f32 %v942, %v1229
        %v1250 = vsub.f32 %v988, %v1232
        %v1251 = vsub.f32 %v1034, %v1235
        %v1252 = vsub.f32 %v1080, %v1238
        %v1253 = vsub.f32 %v1126, %v1241
        %v1254 = vsub.f32 %v1172, %v1244
        %v1255 = vsub.f32 %v1218, %v1247
        %v1256 = vmul.f32 %v1248, 1.442695
        %v1257 = vpow.pop %v1256
        %v1258 = vmul.f32 %v1249, 1.442695
        %v1259 = vpow.pop %v1258
        %v1260 = vmul.f32 %v1250, 1.442695
        %v1261 = vpow.pop %v1260
        %v1262 = vmul.f32 %v1251, 1.442695
        %v1263 = vpow.pop %v1262
        %v1264 = vmul.f32 %v1252, 1.442695
        %v1265 = vpow.pop %v1264
        %v1266 = vmul.f32 %v1253, 1.442695
        %v1267 = vpow.pop %v1266
        %v1268 = vmul.f32 %v1254, 1.442695
        %v1269 = vpow.pop %v1268
        %v1270 = vmul.f32 %v1255, 1.442695
        %v1271 = vpow.pop %v1270
        %v1272 = vsel %vm1223, %v1257, 0.0
        %1273 = vadd.xlane.f32.xlu0 %v1272
        %v1274 = vpop.xlane.xlu0 %1273
        %v1275 = vsel %vm1223, %v1259, 0.0
        %1276 = vadd.xlane.f32.xlu0 %v1275
        %v1277 = vpop.xlane.xlu0 %1276
        %v1278 = vsel %vm1223, %v1261, 0.0
        %1279 = vadd.xlane.f32.xlu0 %v1278
        %v1280 = vpop.xlane.xlu0 %1279
        %v1281 = vsel %vm1223, %v1263, 0.0
        %1282 = vadd.xlane.f32.xlu0 %v1281
        %v1283 = vpop.xlane.xlu0 %1282
        %v1284 = vsel %vm1223, %v1265, 0.0
        %1285 = vadd.xlane.f32.xlu0 %v1284
        %v1286 = vpop.xlane.xlu0 %1285
        %v1287 = vsel %vm1223, %v1267, 0.0
        %1288 = vadd.xlane.f32.xlu0 %v1287
        %v1289 = vpop.xlane.xlu0 %1288
        %v1290 = vsel %vm1223, %v1269, 0.0
        %1291 = vadd.xlane.f32.xlu0 %v1290
        %v1292 = vpop.xlane.xlu0 %1291
        %v1293 = vsel %vm1223, %v1271, 0.0
        %1294 = vadd.xlane.f32.xlu0 %v1293
        %v1295 = vpop.xlane.xlu0 %1294
        %v1296 = vrcp.pop %v1274
        %v1297 = vrcp.pop %v1277
        %v1298 = vrcp.pop %v1280
        %v1299 = vrcp.pop %v1283
        %v1300 = vrcp.pop %v1286
        %v1301 = vrcp.pop %v1289
        %v1302 = vrcp.pop %v1292
        %v1303 = vrcp.pop %v1295
        %v1304 = vmul.f32 %v1257, %v1296
        %v1305 = vmul.f32 %v1259, %v1297
        %v1306 = vmul.f32 %v1261, %v1298
        %v1307 = vmul.f32 %v1263, %v1299
        %v1308 = vmul.f32 %v1265, %v1300
        %v1309 = vmul.f32 %v1267, %v1301
        %v1310 = vmul.f32 %v1269, %v1302
        %v1311 = vmul.f32 %v1271, %v1303
        %v1312 = vpack.c.bf16 %v1304, %v1304
        %v1313 = vpack.c.bf16 %v1305, %v1305
        %v1314 = vpack.c.bf16 %v1306, %v1306
        %v1315 = vpack.c.bf16 %v1307, %v1307
        %v1316 = vpack.c.bf16 %v1308, %v1308
        %v1317 = vpack.c.bf16 %v1309, %v1309
        %v1318 = vpack.c.bf16 %v1310, %v1310
        %v1319 = vpack.c.bf16 %v1311, %v1311
        %v1321 = vsel %vm1223, %v1312, 0
        %1323 = vmatprep.subr.bf16.mxu0 0
        %1324 = vmatpush1.bf16.msra.mxu0 %v846
        %1325 = vmatprep.subr.bf16.mxu0 0
        %1326 = vmatpush1.bf16.msra.mxu0 0
        %1327 = vmatprep.subr.bf16.mxu0 0
        %1328 = vmatpush1.bf16.msra.mxu0 0
        %1329 = vmatprep.subr.bf16.mxu0 0
        %1330 = vmatpush1.bf16.msra.mxu0 0
        %1331 = vmatprep.subr.bf16.mxu0 0
        %1332 = vmatpush1.bf16.msra.mxu0 0
        %1333 = vmatprep.subr.bf16.mxu0 0
        %1334 = vmatpush1.bf16.msra.mxu0 0
        %1335 = vmatprep.subr.bf16.mxu0 0
        %1336 = vmatpush1.bf16.msra.mxu0 0
        %1337 = vmatprep.subr.bf16.mxu0 0
        %1338 = vmatpush1.bf16.msra.mxu0 0
        %1339 = vmatprep.subr.bf16.mxu0 0
        %1340 = vmatpush1.bf16.msra.mxu0 0
        %1341 = vmatprep.subr.bf16.mxu0 0
        %1342 = vmatpush1.bf16.msra.mxu0 0
        %1343 = vmatprep.subr.bf16.mxu0 0
        %1344 = vmatpush1.bf16.msra.mxu0 0
        %1345 = vmatprep.subr.bf16.mxu0 0
        %1346 = vmatpush1.bf16.msra.mxu0 0
        %1347 = vmatprep.subr.bf16.mxu0 0
        %1348 = vmatpush1.bf16.msra.mxu0 0
        %1349 = vmatprep.subr.bf16.mxu0 0
        %1350 = vmatpush1.bf16.msra.mxu0 0
        %1351 = vmatprep.subr.bf16.mxu0 0
        %1352 = vmatpush1.bf16.msra.mxu0 0
        %1353 = vmatprep.subr.bf16.mxu0 0
        %1354 = vmatpush1.bf16.msra.mxu0 0
        %1355 = vmatprep.mubr.bf16.mxu0 0
        %1356 = vmatmul.mubr.bf16.gmra.mrb[0].mxu0 %v1321
        %v1357 = vpop.f32.mrb[0].mxu0
        %v1358 = vadd.f32 0.0, %v1357
        %v1359 = vpop.f32.mrb[0].mxu0
        %v1360 = vpop.f32.mrb[0].mxu0
        %v1361 = vpop.f32.mrb[0].mxu0
        %1362 = vdwg.mxu0
        %v1364 = vsel %vm1223, %v1313, 0
        %1366 = vmatprep.subr.bf16.mxu0 0
        %1367 = vmatpush1.bf16.msra.mxu0 %v847
        %1368 = vmatprep.subr.bf16.mxu0 0
        %1369 = vmatpush1.bf16.msra.mxu0 0
        %1370 = vmatprep.subr.bf16.mxu0 0
        %1371 = vmatpush1.bf16.msra.mxu0 0
        %1372 = vmatprep.subr.bf16.mxu0 0
        %1373 = vmatpush1.bf16.msra.mxu0 0
        %1374 = vmatprep.subr.bf16.mxu0 0
        %1375 = vmatpush1.bf16.msra.mxu0 0
        %1376 = vmatprep.subr.bf16.mxu0 0
        %1377 = vmatpush1.bf16.msra.mxu0 0
        %1378 = vmatprep.subr.bf16.mxu0 0
        %1379 = vmatpush1.bf16.msra.mxu0 0
        %1380 = vmatprep.subr.bf16.mxu0 0
        %1381 = vmatpush1.bf16.msra.mxu0 0
        %1382 = vmatprep.subr.bf16.mxu0 0
        %1383 = vmatpush1.bf16.msra.mxu0 0
        %1384 = vmatprep.subr.bf16.mxu0 0
        %1385 = vmatpush1.bf16.msra.mxu0 0
        %1386 = vmatprep.subr.bf16.mxu0 0
        %1387 = vmatpush1.bf16.msra.mxu0 0
        %1388 = vmatprep.subr.bf16.mxu0 0
        %1389 = vmatpush1.bf16.msra.mxu0 0
        %1390 = vmatprep.subr.bf16.mxu0 0
        %1391 = vmatpush1.bf16.msra.mxu0 0
        %1392 = vmatprep.subr.bf16.mxu0 0
        %1393 = vmatpush1.bf16.msra.mxu0 0
        %1394 = vmatprep.subr.bf16.mxu0 0
        %1395 = vmatpush1.bf16.msra.mxu0 0
        %1396 = vmatprep.subr.bf16.mxu0 0
        %1397 = vmatpush1.bf16.msra.mxu0 0
        %1398 = vmatprep.mubr.bf16.mxu0 0
        %1399 = vmatmul.mubr.bf16.gmra.mrb[0].mxu0 %v1364
        %v1400 = vpop.f32.mrb[0].mxu0
        %v1401 = vadd.f32 0.0, %v1400
        %v1402 = vpop.f32.mrb[0].mxu0
        %v1403 = vpop.f32.mrb[0].mxu0
        %v1404 = vpop.f32.mrb[0].mxu0
        %1405 = vdwg.mxu0
        %v1407 = vsel %vm1223, %v1314, 0
        %1409 = vmatprep.subr.bf16.mxu0 0
        %1410 = vmatpush1.bf16.msra.mxu0 %v848
        %1411 = vmatprep.subr.bf16.mxu0 0
        %1412 = vmatpush1.bf16.msra.mxu0 0
        %1413 = vmatprep.subr.bf16.mxu0 0
        %1414 = vmatpush1.bf16.msra.mxu0 0
        %1415 = vmatprep.subr.bf16.mxu0 0
        %1416 = vmatpush1.bf16.msra.mxu0 0
        %1417 = vmatprep.subr.bf16.mxu0 0
        %1418 = vmatpush1.bf16.msra.mxu0 0
        %1419 = vmatprep.subr.bf16.mxu0 0
        %1420 = vmatpush1.bf16.msra.mxu0 0
        %1421 = vmatprep.subr.bf16.mxu0 0
        %1422 = vmatpush1.bf16.msra.mxu0 0
        %1423 = vmatprep.subr.bf16.mxu0 0
        %1424 = vmatpush1.bf16.msra.mxu0 0
        %1425 = vmatprep.subr.bf16.mxu0 0
        %1426 = vmatpush1.bf16.msra.mxu0 0
        %1427 = vmatprep.subr.bf16.mxu0 0
        %1428 = vmatpush1.bf16.msra.mxu0 0
        %1429 = vmatprep.subr.bf16.mxu0 0
        %1430 = vmatpush1.bf16.msra.mxu0 0
        %1431 = vmatprep.subr.bf16.mxu0 0
        %1432 = vmatpush1.bf16.msra.mxu0 0
        %1433 = vmatprep.subr.bf16.mxu0 0
        %1434 = vmatpush1.bf16.msra.mxu0 0
        %1435 = vmatprep.subr.bf16.mxu0 0
        %1436 = vmatpush1.bf16.msra.mxu0 0
        %1437 = vmatprep.subr.bf16.mxu0 0
        %1438 = vmatpush1.bf16.msra.mxu0 0
        %1439 = vmatprep.subr.bf16.mxu0 0
        %1440 = vmatpush1.bf16.msra.mxu0 0
        %1441 = vmatprep.mubr.bf16.mxu0 0
        %1442 = vmatmul.mubr.bf16.gmra.mrb[0].mxu0 %v1407
        %v1443 = vpop.f32.mrb[0].mxu0
        %v1444 = vadd.f32 0.0, %v1443
        %v1445 = vpop.f32.mrb[0].mxu0
        %v1446 = vpop.f32.mrb[0].mxu0
        %v1447 = vpop.f32.mrb[0].mxu0
        %1448 = vdwg.mxu0
        %v1450 = vsel %vm1223, %v1315, 0
        %1452 = vmatprep.subr.bf16.mxu0 0
        %1453 = vmatpush1.bf16.msra.mxu0 %v849
        %1454 = vmatprep.subr.bf16.mxu0 0
        %1455 = vmatpush1.bf16.msra.mxu0 0
        %1456 = vmatprep.subr.bf16.mxu0 0
        %1457 = vmatpush1.bf16.msra.mxu0 0
        %1458 = vmatprep.subr.bf16.mxu0 0
        %1459 = vmatpush1.bf16.msra.mxu0 0
        %1460 = vmatprep.subr.bf16.mxu0 0
        %1461 = vmatpush1.bf16.msra.mxu0 0
        %1462 = vmatprep.subr.bf16.mxu0 0
        %1463 = vmatpush1.bf16.msra.mxu0 0
        %1464 = vmatprep.subr.bf16.mxu0 0
        %1465 = vmatpush1.bf16.msra.mxu0 0
        %1466 = vmatprep.subr.bf16.mxu0 0
        %1467 = vmatpush1.bf16.msra.mxu0 0
        %1468 = vmatprep.subr.bf16.mxu0 0
        %1469 = vmatpush1.bf16.msra.mxu0 0
        %1470 = vmatprep.subr.bf16.mxu0 0
        %1471 = vmatpush1.bf16.msra.mxu0 0
        %1472 = vmatprep.subr.bf16.mxu0 0
        %1473 = vmatpush1.bf16.msra.mxu0 0
        %1474 = vmatprep.subr.bf16.mxu0 0
        %1475 = vmatpush1.bf16.msra.mxu0 0
        %1476 = vmatprep.subr.bf16.mxu0 0
        %1477 = vmatpush1.bf16.msra.mxu0 0
        %1478 = vmatprep.subr.bf16.mxu0 0
        %1479 = vmatpush1.bf16.msra.mxu0 0
        %1480 = vmatprep.subr.bf16.mxu0 0
        %1481 = vmatpush1.bf16.msra.mxu0 0
        %1482 = vmatprep.subr.bf16.mxu0 0
        %1483 = vmatpush1.bf16.msra.mxu0 0
        %1484 = vmatprep.mubr.bf16.mxu0 0
        %1485 = vmatmul.mubr.bf16.gmra.mrb[0].mxu0 %v1450
        %v1486 = vpop.f32.mrb[0].mxu0
        %v1487 = vadd.f32 0.0, %v1486
        %v1488 = vpop.f32.mrb[0].mxu0
        %v1489 = vpop.f32.mrb[0].mxu0
        %v1490 = vpop.f32.mrb[0].mxu0
        %1491 = vdwg.mxu0
        %v1493 = vsel %vm1223, %v1316, 0
        %1495 = vmatprep.subr.bf16.mxu0 0
        %1496 = vmatpush1.bf16.msra.mxu0 %v850
        %1497 = vmatprep.subr.bf16.mxu0 0
        %1498 = vmatpush1.bf16.msra.mxu0 0
        %1499 = vmatprep.subr.bf16.mxu0 0
        %1500 = vmatpush1.bf16.msra.mxu0 0
        %1501 = vmatprep.subr.bf16.mxu0 0
        %1502 = vmatpush1.bf16.msra.mxu0 0
        %1503 = vmatprep.subr.bf16.mxu0 0
        %1504 = vmatpush1.bf16.msra.mxu0 0
        %1505 = vmatprep.subr.bf16.mxu0 0
        %1506 = vmatpush1.bf16.msra.mxu0 0
        %1507 = vmatprep.subr.bf16.mxu0 0
        %1508 = vmatpush1.bf16.msra.mxu0 0
        %1509 = vmatprep.subr.bf16.mxu0 0
        %1510 = vmatpush1.bf16.msra.mxu0 0
        %1511 = vmatprep.subr.bf16.mxu0 0
        %1512 = vmatpush1.bf16.msra.mxu0 0
        %1513 = vmatprep.subr.bf16.mxu0 0
        %1514 = vmatpush1.bf16.msra.mxu0 0
        %1515 = vmatprep.subr.bf16.mxu0 0
        %1516 = vmatpush1.bf16.msra.mxu0 0
        %1517 = vmatprep.subr.bf16.mxu0 0
        %1518 = vmatpush1.bf16.msra.mxu0 0
        %1519 = vmatprep.subr.bf16.mxu0 0
        %1520 = vmatpush1.bf16.msra.mxu0 0
        %1521 = vmatprep.subr.bf16.mxu0 0
        %1522 = vmatpush1.bf16.msra.mxu0 0
        %1523 = vmatprep.subr.bf16.mxu0 0
        %1524 = vmatpush1.bf16.msra.mxu0 0
        %1525 = vmatprep.subr.bf16.mxu0 0
        %1526 = vmatpush1.bf16.msra.mxu0 0
        %1527 = vmatprep.mubr.bf16.mxu0 0
        %1528 = vmatmul.mubr.bf16.gmra.mrb[0].mxu0 %v1493
        %v1529 = vpop.f32.mrb[0].mxu0
        %v1530 = vadd.f32 0.0, %v1529
        %v1531 = vpop.f32.mrb[0].mxu0
        %v1532 = vpop.f32.mrb[0].mxu0
        %v1533 = vpop.f32.mrb[0].mxu0
        %1534 = vdwg.mxu0
        %v1536 = vsel %vm1223, %v1317, 0
        %1538 = vmatprep.subr.bf16.mxu0 0
        %1539 = vmatpush1.bf16.msra.mxu0 %v851
        %1540 = vmatprep.subr.bf16.mxu0 0
        %1541 = vmatpush1.bf16.msra.mxu0 0
        %1542 = vmatprep.subr.bf16.mxu0 0
        %1543 = vmatpush1.bf16.msra.mxu0 0
        %1544 = vmatprep.subr.bf16.mxu0 0
        %1545 = vmatpush1.bf16.msra.mxu0 0
        %1546 = vmatprep.subr.bf16.mxu0 0
        %1547 = vmatpush1.bf16.msra.mxu0 0
        %1548 = vmatprep.subr.bf16.mxu0 0
        %1549 = vmatpush1.bf16.msra.mxu0 0
        %1550 = vmatprep.subr.bf16.mxu0 0
        %1551 = vmatpush1.bf16.msra.mxu0 0
        %1552 = vmatprep.subr.bf16.mxu0 0
        %1553 = vmatpush1.bf16.msra.mxu0 0
        %1554 = vmatprep.subr.bf16.mxu0 0
        %1555 = vmatpush1.bf16.msra.mxu0 0
        %1556 = vmatprep.subr.bf16.mxu0 0
        %1557 = vmatpush1.bf16.msra.mxu0 0
        %1558 = vmatprep.subr.bf16.mxu0 0
        %1559 = vmatpush1.bf16.msra.mxu0 0
        %1560 = vmatprep.subr.bf16.mxu0 0
        %1561 = vmatpush1.bf16.msra.mxu0 0
        %1562 = vmatprep.subr.bf16.mxu0 0
        %1563 = vmatpush1.bf16.msra.mxu0 0
        %1564 = vmatprep.subr.bf16.mxu0 0
        %1565 = vmatpush1.bf16.msra.mxu0 0
        %1566 = vmatprep.subr.bf16.mxu0 0
        %1567 = vmatpush1.bf16.msra.mxu0 0
        %1568 = vmatprep.subr.bf16.mxu0 0
        %1569 = vmatpush1.bf16.msra.mxu0 0
        %1570 = vmatprep.mubr.bf16.mxu0 0
        %1571 = vmatmul.mubr.bf16.gmra.mrb[0].mxu0 %v1536
        %v1572 = vpop.f32.mrb[0].mxu0
        %v1573 = vadd.f32 0.0, %v1572
        %v1574 = vpop.f32.mrb[0].mxu0
        %v1575 = vpop.f32.mrb[0].mxu0
        %v1576 = vpop.f32.mrb[0].mxu0
        %1577 = vdwg.mxu0
        %v1579 = vsel %vm1223, %v1318, 0
        %1581 = vmatprep.subr.bf16.mxu0 0
        %1582 = vmatpush1.bf16.msra.mxu0 %v852
        %1583 = vmatprep.subr.bf16.mxu0 0
        %1584 = vmatpush1.bf16.msra.mxu0 0
        %1585 = vmatprep.subr.bf16.mxu0 0
        %1586 = vmatpush1.bf16.msra.mxu0 0
        %1587 = vmatprep.subr.bf16.mxu0 0
        %1588 = vmatpush1.bf16.msra.mxu0 0
        %1589 = vmatprep.subr.bf16.mxu0 0
        %1590 = vmatpush1.bf16.msra.mxu0 0
        %1591 = vmatprep.subr.bf16.mxu0 0
        %1592 = vmatpush1.bf16.msra.mxu0 0
        %1593 = vmatprep.subr.bf16.mxu0 0
        %1594 = vmatpush1.bf16.msra.mxu0 0
        %1595 = vmatprep.subr.bf16.mxu0 0
        %1596 = vmatpush1.bf16.msra.mxu0 0
        %1597 = vmatprep.subr.bf16.mxu0 0
        %1598 = vmatpush1.bf16.msra.mxu0 0
        %1599 = vmatprep.subr.bf16.mxu0 0
        %1600 = vmatpush1.bf16.msra.mxu0 0
        %1601 = vmatprep.subr.bf16.mxu0 0
        %1602 = vmatpush1.bf16.msra.mxu0 0
        %1603 = vmatprep.subr.bf16.mxu0 0
        %1604 = vmatpush1.bf16.msra.mxu0 0
        %1605 = vmatprep.subr.bf16.mxu0 0
        %1606 = vmatpush1.bf16.msra.mxu0 0
        %1607 = vmatprep.subr.bf16.mxu0 0
        %1608 = vmatpush1.bf16.msra.mxu0 0
        %1609 = vmatprep.subr.bf16.mxu0 0
        %1610 = vmatpush1.bf16.msra.mxu0 0
        %1611 = vmatprep.subr.bf16.mxu0 0
        %1612 = vmatpush1.bf16.msra.mxu0 0
        %1613 = vmatprep.mubr.bf16.mxu0 0
        %1614 = vmatmul.mubr.bf16.gmra.mrb[0].mxu0 %v1579
        %v1615 = vpop.f32.mrb[0].mxu0
        %v1616 = vadd.f32 0.0, %v1615
        %v1617 = vpop.f32.mrb[0].mxu0
        %v1618 = vpop.f32.mrb[0].mxu0
        %v1619 = vpop.f32.mrb[0].mxu0
        %1620 = vdwg.mxu0
        %v1622 = vsel %vm1223, %v1319, 0
        %1624 = vmatprep.subr.bf16.mxu0 0
        %1625 = vmatpush1.bf16.msra.mxu0 %v853
        %1626 = vmatprep.subr.bf16.mxu0 0
        %1627 = vmatpush1.bf16.msra.mxu0 0
        %1628 = vmatprep.subr.bf16.mxu0 0
        %1629 = vmatpush1.bf16.msra.mxu0 0
        %1630 = vmatprep.subr.bf16.mxu0 0
        %1631 = vmatpush1.bf16.msra.mxu0 0
        %1632 = vmatprep.subr.bf16.mxu0 0
        %1633 = vmatpush1.bf16.msra.mxu0 0
        %1634 = vmatprep.subr.bf16.mxu0 0
        %1635 = vmatpush1.bf16.msra.mxu0 0
        %1636 = vmatprep.subr.bf16.mxu0 0
        %1637 = vmatpush1.bf16.msra.mxu0 0
        %1638 = vmatprep.subr.bf16.mxu0 0
        %1639 = vmatpush1.bf16.msra.mxu0 0
        %1640 = vmatprep.subr.bf16.mxu0 0
        %1641 = vmatpush1.bf16.msra.mxu0 0
        %1642 = vmatprep.subr.bf16.mxu0 0
        %1643 = vmatpush1.bf16.msra.mxu0 0
        %1644 = vmatprep.subr.bf16.mxu0 0
        %1645 = vmatpush1.bf16.msra.mxu0 0
        %1646 = vmatprep.subr.bf16.mxu0 0
        %1647 = vmatpush1.bf16.msra.mxu0 0
        %1648 = vmatprep.subr.bf16.mxu0 0
        %1649 = vmatpush1.bf16.msra.mxu0 0
        %1650 = vmatprep.subr.bf16.mxu0 0
        %1651 = vmatpush1.bf16.msra.mxu0 0
        %1652 = vmatprep.subr.bf16.mxu0 0
        %1653 = vmatpush1.bf16.msra.mxu0 0
        %1654 = vmatprep.subr.bf16.mxu0 0
        %1655 = vmatpush1.bf16.msra.mxu0 0
        %1656 = vmatprep.mubr.bf16.mxu0 0
        %1657 = vmatmul.mubr.bf16.gmra.mrb[0].mxu0 %v1622
        %v1658 = vpop.f32.mrb[0].mxu0
        %v1659 = vadd.f32 0.0, %v1658
        %v1660 = vpop.f32.mrb[0].mxu0
        %v1661 = vpop.f32.mrb[0].mxu0
        %v1662 = vpop.f32.mrb[0].mxu0
        %1663 = vdwg.mxu0
        %1666 = vrot.lane.b32.xlu0 %v1444, 8
        %v1667 = vpop.permute.xlu0 %1666
        %1668 = vrot.lane.b32.xlu0 %v1487, 8
        %v1669 = vpop.permute.xlu0 %1668
        %1674 = vrot.lane.b32.xlu0 %v1530, 16
        %v1675 = vpop.permute.xlu0 %1674
        %1676 = vrot.lane.b32.xlu0 %v1573, 16
        %v1677 = vpop.permute.xlu0 %1676
        %1682 = vrot.lane.b32.xlu0 %v1616, 24
        %v1683 = vpop.permute.xlu0 %1682
        %1684 = vrot.lane.b32.xlu0 %v1659, 24
        %v1685 = vpop.permute.xlu0 %1684
        %v1688 = vsel %vm854, %v1358, %v1667
        %v1689 = vsel %vm854, %v1401, %v1669
        %v1690 = vsel %vm1223, %v1688, %v1675
        %v1691 = vsel %vm1223, %v1689, %v1677
        %vm1692 = vcmask 195584
        %v1693 = vsel %vm1692, %v1690, %v1683
        %v1694 = vsel %vm1692, %v1691, %v1685
        %v1695 = vpack.c.bf16 %v1694, %v1693
        %v1696 = vld [vmem:[%s9] sm:$0xf]
        %v1697 = vld [vmem:[%s9 + $0x4] sm:$0xf]
        %v1698 = vld [vmem:[%s9 + $0x8] sm:$0xf]
        %v1699 = vld [vmem:[%s9 + $0xc] sm:$0xf]
        %v1700 = vld [vmem:[%s10] sm:$0x1]
        %v1702 = vlaneseq
        %v1703 = vshrl.u32 %v1702, 7
        %v1704 = vsub.s32 0, %v1703
        %v1705 = vrot.slane %v1700, %v1704
        %v1711 = vunpack.c.l.b16 %v1696
        %v1712 = vunpack.c.l.b16 %v1697
        %v1713 = vunpack.c.l.b16 %v1698
        %v1714 = vunpack.c.l.b16 %v1699
        %v1715 = vpack.c.b16 %v1712, %v1711
        %v1716 = vpack.c.b16 %v1714, %v1713
        %v1720 = vsel %vm492, %v1695, 0
        %1722 = vmatprep.subr.bf16.mxu0 0
        %1723 = vmatpush1.bf16.msra.mxu0 %v1715
        %1724 = vmatprep.subr.bf16.mxu0 0
        %1725 = vmatpush1.bf16.msra.mxu0 %v1716
        %1726 = vmatprep.subr.bf16.mxu0 0
        %1727 = vmatpush1.bf16.msra.mxu0 0
        %1728 = vmatprep.subr.bf16.mxu0 0
        %1729 = vmatpush1.bf16.msra.mxu0 0
        %1730 = vmatprep.subr.bf16.mxu0 0
        %1731 = vmatpush1.bf16.msra.mxu0 0
        %1732 = vmatprep.subr.bf16.mxu0 0
        %1733 = vmatpush1.bf16.msra.mxu0 0
        %1734 = vmatprep.subr.bf16.mxu0 0
        %1735 = vmatpush1.bf16.msra.mxu0 0
        %1736 = vmatprep.subr.bf16.mxu0 0
        %1737 = vmatpush1.bf16.msra.mxu0 0
        %1738 = vmatprep.subr.bf16.mxu0 0
        %1739 = vmatpush1.bf16.msra.mxu0 0
        %1740 = vmatprep.subr.bf16.mxu0 0
        %1741 = vmatpush1.bf16.msra.mxu0 0
        %1742 = vmatprep.subr.bf16.mxu0 0
        %1743 = vmatpush1.bf16.msra.mxu0 0
        %1744 = vmatprep.subr.bf16.mxu0 0
        %1745 = vmatpush1.bf16.msra.mxu0 0
        %1746 = vmatprep.subr.bf16.mxu0 0
        %1747 = vmatpush1.bf16.msra.mxu0 0
        %1748 = vmatprep.subr.bf16.mxu0 0
        %1749 = vmatpush1.bf16.msra.mxu0 0
        %1750 = vmatprep.subr.bf16.mxu0 0
        %1751 = vmatpush1.bf16.msra.mxu0 0
        %1752 = vmatprep.subr.bf16.mxu0 0
        %1753 = vmatpush1.bf16.msra.mxu0 0
        %1754 = vmatprep.mubr.bf16.mxu0 0
        %1755 = vmatmul.mubr.bf16.gmra.mrb[0].mxu0 %v1720
        %v1756 = vpop.f32.mrb[0].mxu0
        %v1757 = vadd.f32 %v1705, %v1756
        %v1758 = vpop.f32.mrb[0].mxu0
        %v1759 = vpop.f32.mrb[0].mxu0
        %v1760 = vadd.f32 %v1705, %v1759
        %v1761 = vpop.f32.mrb[0].mxu0
        %1762 = vdwg.mxu0
        %v1763 = vpack.c.bf16 %v1757, %v1757
        %v1764 = vpack.c.bf16 %v1760, %v1760
        %vm1765 = vcmask 257024
        %1766 = vst.msk [vmem:[%s431] sm:$0xf] %vm1765, %v1763
        %1767 = vst.msk [vmem:[%s431 + $0x4] sm:$0xf] %vm1765, %v1764
        %s1768 = sand.u32 %s280, 1
        %s1769 = scalar_lea.sflag [#allocation4], %s1768
        %s1770 = sand.u32 %s280, 1
        %s1771 = smul.addr %s1770, 8
        %s1772 = scalar_lea.vmem [#allocation5], %s1771
        // Predicated region
        $region69: #{tpu_custom_call.1} parent=63 // pred_check
          %p1773 = pneg %p290
        $region70: #{tpu_custom_call.1} parent=63 // pred_check_branch
          %1775 = sbr.rel (%p1773) target = $region72
        $region71: #{tpu_custom_call.1} parent=63 // pred_region
          %s1776 = smul.u32 2, %s26
          %s1778 = ssub.s32 128, 128
          %1779 = vsyncadd %s1769, %s1778
          %s1780 = smul.addr %s1776, 64
          %s1781 = scalar_lea.hbm %s11, %s1780
          %s1782 = sshll.u32 %s1772, 4
          %s1783 = int_to_ptr.vmem [resolvable:$true] %s1782
          %1788 = dma.vmem_to_hbm [thread:$0]  %s1783, 128, %s1781, %s1769, 64, 64, 4
        $region72: #{tpu_custom_call.1} parent=63 // pred_fallthru
          _
      $region64: #{tpu_custom_call.1} parent=5 // pred_fallthru
        _
      %p1789 = scmp.le.s32.totalorder 2, %s21
      // Predicated region
      $region73: #{tpu_custom_call.1} parent=5 // pred_check
        %p1790 = pneg %p1789
      $region74: #{tpu_custom_call.1} parent=5 // pred_check_branch
        %1792 = sbr.rel (%p1790) target = $region76
      $region75: #{tpu_custom_call.1} parent=5 // pred_region
        %s1793 = ssub.s32 %s21, 2
        // Predicated region
        $region77: #{tpu_custom_call.1} parent=75 // pred_check
          %p1794 = pneg %p296
        $region78: #{tpu_custom_call.1} parent=75 // pred_check_branch
          %1796 = sbr.rel (%p1794) target = $region80
        $region79: #{tpu_custom_call.1} parent=75 // pred_region
          %s1797 = sand.u32 %s281, 1
          %s1798 = scalar_lea.sflag [#allocation4], %s1797
          %s1799 = sand.u32 %s281, 1
          %s1800 = smul.addr %s1799, 8
          %s1801 = scalar_lea.vmem [#allocation5], %s1800
          %1802 = dma.done %s1798, 128
        $region80: #{tpu_custom_call.1} parent=75 // pred_fallthru
          _
      $region76: #{tpu_custom_call.1} parent=5 // pred_fallthru
        _
    $region6: #{tpu_custom_call.1} parent=1 // loop_footer
      %s25 = sadd.s32 1, %s21
    $region7: #{tpu_custom_call.1} parent=1 // loop_footer_branch
      %20 = sbr.rel target = $region3
    $region8: #{tpu_custom_call.1} parent=1 // loop_exit
      _
    %1803 = vsyncpa [#allocation3], 1
    %s1804 = scalar_lea.sflag [#allocation3], 1
    %1805 = vsyncpa %s1804, 1
    %1806 = vsyncpa [#allocation4], 1
    %s1807 = scalar_lea.sflag [#allocation4], 1
    %1808 = vsyncpa %s1807, 1

</llo_original>
